<compile_context>
chip_gen: v7x
topology: tpu7x:2x2x1
jax: 0.10.0
libtpu: 0.0.40
codegen_flags: <defaults>
</compile_context>

<pallas_src>
import jax
import jax.numpy as jnp
from jax.experimental import pallas as pl
from jax.experimental.pallas import tpu as pltpu


def _ac_kernel(x_ref,
               w1_ref, b1_ref,
               w2_ref, b2_ref,
               w3_ref, b3_ref,
               wh_ref, bh_ref,
               pi_ref, v_ref):
    # fc1 -> ReLU  (bf16 MXU inputs, f32 accumulation, f32 bias/ReLU)
    h = jnp.dot(x_ref[...].astype(jnp.bfloat16), w1_ref[...],
                preferred_element_type=jnp.float32) + b1_ref[...]
    h = jnp.maximum(h, 0.0)

    # fc2 -> ReLU
    h = jnp.dot(h.astype(jnp.bfloat16), w2_ref[...],
                preferred_element_type=jnp.float32) + b2_ref[...]
    h = jnp.maximum(h, 0.0)

    # fc3 -> ReLU
    h = jnp.dot(h.astype(jnp.bfloat16), w3_ref[...],
                preferred_element_type=jnp.float32) + b3_ref[...]
    h = jnp.maximum(h, 0.0)

    # fused pi|v head: a single MXU push, then a lane-aligned slice (NA % 128 == 0)
    out = jnp.dot(h.astype(jnp.bfloat16), wh_ref[...],
                  preferred_element_type=jnp.float32) + bh_ref[...]
    na = pi_ref.shape[-1]
    pi_ref[...] = out[:, :na]
    v_ref[...] = out[:, na:]


def actor_critic_forward(obs, params, *, batch_tile=128):
    """obs: (B, D) f32.  params: bf16 weights (in,out) + f32 biases (1,out),
    with the two heads pre-fused into wh=(F3, 2*NA), bh=(1, 2*NA)."""
    B, D = obs.shape
    F1 = params["w1"].shape[1]
    F2 = params["w2"].shape[1]
    F3 = params["w3"].shape[1]
    NA = params["wh"].shape[1] // 2

    tb = min(batch_tile, B)
    assert B % tb == 0, "batch must be a multiple of the batch tile"
    grid = (B // tb,)

    in_specs = [
        pl.BlockSpec((tb, D), lambda i: (i, 0)),                # obs streams
        pl.BlockSpec(params["w1"].shape, lambda i: (0, 0)),     # weights resident
        pl.BlockSpec(params["b1"].shape, lambda i: (0, 0)),
        pl.BlockSpec(params["w2"].shape, lambda i: (0, 0)),
        pl.BlockSpec(params["b2"].shape, lambda i: (0, 0)),
        pl.BlockSpec(params["w3"].shape, lambda i: (0, 0)),
        pl.BlockSpec(params["b3"].shape, lambda i: (0, 0)),
        pl.BlockSpec(params["wh"].shape, lambda i: (0, 0)),
        pl.BlockSpec(params["bh"].shape, lambda i: (0, 0)),
    ]
    out_specs = [
        pl.BlockSpec((tb, NA), lambda i: (i, 0)),
        pl.BlockSpec((tb, NA), lambda i: (i, 0)),
    ]

    flops = 2 * B * (D * F1 + F1 * F2 + F2 * F3 + F3 * 2 * NA)
    bytes_accessed = (
        obs.size * obs.dtype.itemsize
        + sum(p.size * p.dtype.itemsize for p in params.values())
        + 2 * B * NA * 4)
    cost = pl.CostEstimate(flops=flops, transcendentals=0,
                           bytes_accessed=bytes_accessed)

    pi, v = pl.pallas_call(
        _ac_kernel,
        grid=grid,
        in_specs=in_specs,
        out_specs=out_specs,
        out_shape=(jax.ShapeDtypeStruct((B, NA), jnp.float32),
                   jax.ShapeDtypeStruct((B, NA), jnp.float32)),
        compiler_params=pltpu.CompilerParams(
            dimension_semantics=("parallel",)),   # shards batch over v7x's 2 TCs
        cost_estimate=cost,
    )(obs,
      params["w1"], params["b1"],
      params["w2"], params["b2"],
      params["w3"], params["b3"],
      params["wh"], params["bh"])
    return pi, v


def _init_params(key, input_dim, fc1, fc2, fc3, n_actions):
    """Deterministic init (PyTorch-Linear-style uniform bounds), weights as (in,out)."""
    def linear(k, fan_in, fan_out):
        kw, kb = jax.random.split(k)
        bound = 1.0 / jnp.sqrt(jnp.float32(fan_in))
        w = jax.random.uniform(kw, (fan_in, fan_out), jnp.float32, -bound, bound)
        b = jax.random.uniform(kb, (1, fan_out), jnp.float32, -bound, bound)
        return w, b

    k1, k2, k3, k4, k5 = jax.random.split(key, 5)
    w1, b1 = linear(k1, input_dim, fc1)
    w2, b2 = linear(k2, fc1, fc2)
    w3, b3 = linear(k3, fc2, fc3)
    wpi, bpi = linear(k4, fc3, n_actions)
    wv, bv = linear(k5, fc3, n_actions)
    return dict(w1=w1, b1=b1, w2=w2, b2=b2, w3=w3, b3=b3,
                wpi=wpi, bpi=bpi, wv=wv, bv=bv)


def prepare_params(raw):
    """Fuse the two heads and cast weights to bf16 (biases stay f32)."""
    wh = jnp.concatenate([raw["wpi"], raw["wv"]], axis=1)
    bh = jnp.concatenate([raw["bpi"], raw["bv"]], axis=1)
    return dict(
        w1=raw["w1"].astype(jnp.bfloat16), b1=raw["b1"].astype(jnp.float32),
        w2=raw["w2"].astype(jnp.bfloat16), b2=raw["b2"].astype(jnp.float32),
        w3=raw["w3"].astype(jnp.bfloat16), b3=raw["b3"].astype(jnp.float32),
        wh=wh.astype(jnp.bfloat16), bh=bh.astype(jnp.float32),
    )


def _reference_forward(obs, p):
    """Pure-JAX reference with the same bf16-in / f32-accumulate math."""
    def mm(a, w):
        return jnp.dot(a.astype(jnp.bfloat16), w,
                       preferred_element_type=jnp.float32)
    h = jnp.maximum(mm(obs, p["w1"]) + p["b1"], 0.0)
    h = jnp.maximum(mm(h, p["w2"]) + p["b2"], 0.0)
    h = jnp.maximum(mm(h, p["w3"]) + p["b3"], 0.0)
    out = mm(h, p["wh"]) + p["bh"]
    na = p["wh"].shape[1] // 2
    return out[:, :na], out[:, na:]


if __name__ == "__main__":
    # Small, (8,128)-friendly shapes consistent with the module's constructor:
    #   input_dims=(128,), fc1=fc2=fc3=128, n_actions=256
    # Batch 256 so the batch grid (TB=128) and megacore sharding are exercised.
    B, D, F1, F2, F3, NA = 256, 128, 128, 128, 128, 256

    key = jax.random.PRNGKey(0)
    k_obs, k_par = jax.random.split(key)
    obs = jax.random.normal(k_obs, (B, D), jnp.float32)
    raw = _init_params(k_par, D, F1, F2, F3, NA)
    params = prepare_params(raw)

    pi, v = actor_critic_forward(obs, params)
    pi, v = jax.block_until_ready((pi, v))

    pi_ref, v_ref = _reference_forward(obs, params)
    assert pi.shape == (B, NA) and v.shape == (B, NA)
    assert jnp.allclose(pi, pi_ref, atol=2e-2, rtol=2e-2), "pi mismatch"
    assert jnp.allclose(v, v_ref, atol=2e-2, rtol=2e-2), "v mismatch"

    print("KERNEL_OK")
</pallas_src>

<mosaic_0001>
module attributes {stable_mosaic.version = 11 : i64} {
  func.func @_ac_kernel(%arg0: i32, %arg1: memref<128x128xf32, #tpu.memory_space<vmem>>, %arg2: memref<128x128xbf16, #tpu.memory_space<vmem>>, %arg3: memref<1x128xf32, #tpu.memory_space<vmem>>, %arg4: memref<128x128xbf16, #tpu.memory_space<vmem>>, %arg5: memref<1x128xf32, #tpu.memory_space<vmem>>, %arg6: memref<128x128xbf16, #tpu.memory_space<vmem>>, %arg7: memref<1x128xf32, #tpu.memory_space<vmem>>, %arg8: memref<128x512xbf16, #tpu.memory_space<vmem>>, %arg9: memref<1x512xf32, #tpu.memory_space<vmem>>, %arg10: memref<128x256xf32, #tpu.memory_space<vmem>>, %arg11: memref<128x256xf32, #tpu.memory_space<vmem>>) attributes {dimension_semantics = [#tpu.dimension_semantics<parallel>], iteration_bounds = array<i64: 2>, scalar_prefetch = 0 : i64, scratch_operands = 0 : i64, tpu.core_type = #tpu.core_type<tc>, window_params = [{transform_indices = @transform_0, window_bounds = array<i64: 128, 128>}, {pipeline_mode = #tpu.pipeline_mode<synchronous>, transform_indices = @transform_1, window_bounds = array<i64: 128, 128>}, {pipeline_mode = #tpu.pipeline_mode<synchronous>, transform_indices = @transform_2, window_bounds = array<i64: 1, 128>}, {pipeline_mode = #tpu.pipeline_mode<synchronous>, transform_indices = @transform_3, window_bounds = array<i64: 128, 128>}, {pipeline_mode = #tpu.pipeline_mode<synchronous>, transform_indices = @transform_4, window_bounds = array<i64: 1, 128>}, {pipeline_mode = #tpu.pipeline_mode<synchronous>, transform_indices = @transform_5, window_bounds = array<i64: 128, 128>}, {pipeline_mode = #tpu.pipeline_mode<synchronous>, transform_indices = @transform_6, window_bounds = array<i64: 1, 128>}, {pipeline_mode = #tpu.pipeline_mode<synchronous>, transform_indices = @transform_7, window_bounds = array<i64: 128, 512>}, {pipeline_mode = #tpu.pipeline_mode<synchronous>, transform_indices = @transform_8, window_bounds = array<i64: 1, 512>}, {transform_indices = @transform_9, window_bounds = array<i64: 128, 256>}, {transform_indices = @transform_10, window_bounds = array<i64: 128, 256>}]} {
    %c0 = arith.constant 0 : index
    %c0_0 = arith.constant 0 : index
    %0 = vector.load %arg1[%c0, %c0_0] : memref<128x128xf32, #tpu.memory_space<vmem>>, vector<128x128xf32>
    %1 = arith.truncf %0 : vector<128x128xf32> to vector<128x128xbf16>
    %c0_1 = arith.constant 0 : index
    %c0_2 = arith.constant 0 : index
    %2 = vector.load %arg2[%c0_1, %c0_2] : memref<128x128xbf16, #tpu.memory_space<vmem>>, vector<128x128xbf16>
    %cst = arith.constant dense<0.000000e+00> : vector<128x128xf32>
    %3 = tpu.matmul %1, %2, %cst {dimension_numbers = #tpu.dot_dimension_numbers<[1], [0], [0], [1], [0, 0, 1, 1], [], []>} : vector<128x128xbf16>, vector<128x128xbf16>, vector<128x128xf32> -> vector<128x128xf32>
    %c0_3 = arith.constant 0 : index
    %c0_4 = arith.constant 0 : index
    %4 = vector.load %arg3[%c0_3, %c0_4] : memref<1x128xf32, #tpu.memory_space<vmem>>, vector<1x128xf32>
    %5 = vector.broadcast %4 : vector<1x128xf32> to vector<128x128xf32>
    %6 = arith.addf %3, %5 : vector<128x128xf32>
    %cst_5 = arith.constant 0.000000e+00 : f32
    %7 = vector.broadcast %cst_5 : f32 to vector<128x128xf32>
    %8 = arith.maximumf %6, %7 : vector<128x128xf32>
    %9 = arith.truncf %8 : vector<128x128xf32> to vector<128x128xbf16>
    %c0_6 = arith.constant 0 : index
    %c0_7 = arith.constant 0 : index
    %10 = vector.load %arg4[%c0_6, %c0_7] : memref<128x128xbf16, #tpu.memory_space<vmem>>, vector<128x128xbf16>
    %cst_8 = arith.constant dense<0.000000e+00> : vector<128x128xf32>
    %11 = tpu.matmul %9, %10, %cst_8 {dimension_numbers = #tpu.dot_dimension_numbers<[1], [0], [0], [1], [0, 0, 1, 1], [], []>} : vector<128x128xbf16>, vector<128x128xbf16>, vector<128x128xf32> -> vector<128x128xf32>
    %c0_9 = arith.constant 0 : index
    %c0_10 = arith.constant 0 : index
    %12 = vector.load %arg5[%c0_9, %c0_10] : memref<1x128xf32, #tpu.memory_space<vmem>>, vector<1x128xf32>
    %13 = vector.broadcast %12 : vector<1x128xf32> to vector<128x128xf32>
    %14 = arith.addf %11, %13 : vector<128x128xf32>
    %cst_11 = arith.constant 0.000000e+00 : f32
    %15 = vector.broadcast %cst_11 : f32 to vector<128x128xf32>
    %16 = arith.maximumf %14, %15 : vector<128x128xf32>
    %17 = arith.truncf %16 : vector<128x128xf32> to vector<128x128xbf16>
    %c0_12 = arith.constant 0 : index
    %c0_13 = arith.constant 0 : index
    %18 = vector.load %arg6[%c0_12, %c0_13] : memref<128x128xbf16, #tpu.memory_space<vmem>>, vector<128x128xbf16>
    %cst_14 = arith.constant dense<0.000000e+00> : vector<128x128xf32>
    %19 = tpu.matmul %17, %18, %cst_14 {dimension_numbers = #tpu.dot_dimension_numbers<[1], [0], [0], [1], [0, 0, 1, 1], [], []>} : vector<128x128xbf16>, vector<128x128xbf16>, vector<128x128xf32> -> vector<128x128xf32>
    %c0_15 = arith.constant 0 : index
    %c0_16 = arith.constant 0 : index
    %20 = vector.load %arg7[%c0_15, %c0_16] : memref<1x128xf32, #tpu.memory_space<vmem>>, vector<1x128xf32>
    %21 = vector.broadcast %20 : vector<1x128xf32> to vector<128x128xf32>
    %22 = arith.addf %19, %21 : vector<128x128xf32>
    %cst_17 = arith.constant 0.000000e+00 : f32
    %23 = vector.broadcast %cst_17 : f32 to vector<128x128xf32>
    %24 = arith.maximumf %22, %23 : vector<128x128xf32>
    %25 = arith.truncf %24 : vector<128x128xf32> to vector<128x128xbf16>
    %c0_18 = arith.constant 0 : index
    %c0_19 = arith.constant 0 : index
    %26 = vector.load %arg8[%c0_18, %c0_19] : memref<128x512xbf16, #tpu.memory_space<vmem>>, vector<128x512xbf16>
    %cst_20 = arith.constant dense<0.000000e+00> : vector<128x512xf32>
    %27 = tpu.matmul %25, %26, %cst_20 {dimension_numbers = #tpu.dot_dimension_numbers<[1], [0], [0], [1], [0, 0, 1, 1], [], []>} : vector<128x128xbf16>, vector<128x512xbf16>, vector<128x512xf32> -> vector<128x512xf32>
    %c0_21 = arith.constant 0 : index
    %c0_22 = arith.constant 0 : index
    %28 = vector.load %arg9[%c0_21, %c0_22] : memref<1x512xf32, #tpu.memory_space<vmem>>, vector<1x512xf32>
    %29 = vector.broadcast %28 : vector<1x512xf32> to vector<128x512xf32>
    %30 = arith.addf %27, %29 : vector<128x512xf32>
    %31 = vector.extract_strided_slice %30 {offsets = [0, 0], sizes = [128, 256], strides = [1, 1]} : vector<128x512xf32> to vector<128x256xf32>
    %c0_23 = arith.constant 0 : index
    %c0_24 = arith.constant 0 : index
    %32 = vector.load %arg10[%c0_23, %c0_24] : memref<128x256xf32, #tpu.memory_space<vmem>>, vector<128x256xf32>
    tpu.vector_store %arg10[%c0_23, %c0_24], %31 {strides = array<i32>} : memref<128x256xf32, #tpu.memory_space<vmem>>, vector<128x256xf32>,
    %33 = vector.extract_strided_slice %30 {offsets = [0, 256], sizes = [128, 256], strides = [1, 1]} : vector<128x512xf32> to vector<128x256xf32>
    %c0_25 = arith.constant 0 : index
    %c0_26 = arith.constant 0 : index
    %34 = vector.load %arg11[%c0_25, %c0_26] : memref<128x256xf32, #tpu.memory_space<vmem>>, vector<128x256xf32>
    tpu.vector_store %arg11[%c0_25, %c0_26], %33 {strides = array<i32>} : memref<128x256xf32, #tpu.memory_space<vmem>>, vector<128x256xf32>,
    return
  }
  func.func @transform_0(%arg0: i32) -> (i32, i32) {
    %c0_i32 = arith.constant 0 : i32
    %c0_i32_0 = arith.constant 0 : i32
    return %arg0, %c0_i32 : i32, i32
  }
  func.func @transform_1(%arg0: i32) -> (i32, i32) {
    %c0_i32 = arith.constant 0 : i32
    %c0_i32_0 = arith.constant 0 : i32
    %c0_i32_1 = arith.constant 0 : i32
    return %c0_i32, %c0_i32_0 : i32, i32
  }
  func.func @transform_2(%arg0: i32) -> (i32, i32) {
    %c0_i32 = arith.constant 0 : i32
    %c0_i32_0 = arith.constant 0 : i32
    %c0_i32_1 = arith.constant 0 : i32
    return %c0_i32, %c0_i32_0 : i32, i32
  }
  func.func @transform_3(%arg0: i32) -> (i32, i32) {
    %c0_i32 = arith.constant 0 : i32
    %c0_i32_0 = arith.constant 0 : i32
    %c0_i32_1 = arith.constant 0 : i32
    return %c0_i32, %c0_i32_0 : i32, i32
  }
  func.func @transform_4(%arg0: i32) -> (i32, i32) {
    %c0_i32 = arith.constant 0 : i32
    %c0_i32_0 = arith.constant 0 : i32
    %c0_i32_1 = arith.constant 0 : i32
    return %c0_i32, %c0_i32_0 : i32, i32
  }
  func.func @transform_5(%arg0: i32) -> (i32, i32) {
    %c0_i32 = arith.constant 0 : i32
    %c0_i32_0 = arith.constant 0 : i32
    %c0_i32_1 = arith.constant 0 : i32
    return %c0_i32, %c0_i32_0 : i32, i32
  }
  func.func @transform_6(%arg0: i32) -> (i32, i32) {
    %c0_i32 = arith.constant 0 : i32
    %c0_i32_0 = arith.constant 0 : i32
    %c0_i32_1 = arith.constant 0 : i32
    return %c0_i32, %c0_i32_0 : i32, i32
  }
  func.func @transform_7(%arg0: i32) -> (i32, i32) {
    %c0_i32 = arith.constant 0 : i32
    %c0_i32_0 = arith.constant 0 : i32
    %c0_i32_1 = arith.constant 0 : i32
    return %c0_i32, %c0_i32_0 : i32, i32
  }
  func.func @transform_8(%arg0: i32) -> (i32, i32) {
    %c0_i32 = arith.constant 0 : i32
    %c0_i32_0 = arith.constant 0 : i32
    %c0_i32_1 = arith.constant 0 : i32
    return %c0_i32, %c0_i32_0 : i32, i32
  }
  func.func @transform_9(%arg0: i32) -> (i32, i32) {
    %c0_i32 = arith.constant 0 : i32
    %c0_i32_0 = arith.constant 0 : i32
    return %arg0, %c0_i32 : i32, i32
  }
  func.func @transform_10(%arg0: i32) -> (i32, i32) {
    %c0_i32 = arith.constant 0 : i32
    %c0_i32_0 = arith.constant 0 : i32
    return %arg0, %c0_i32 : i32, i32
  }
}

</mosaic_0001>

<llo_original>
// kernel: tpu_custom_call.1
$region0: #{tpu_custom_call.1}
  #allocation0 [shape = 'u32[]', space=smem, size = 0x4, offset = 0x4, fixed_abs, tag = 'smem constant byte address 0x4 - core index']
  #allocation1 [shape = 'u32[144,128]{1,0:T(1,128)}', space=vmem, size = 0x12000, scoped, tag = 'internal scratch']
  %s0 = inlined_call_operand.hbm [shape: f32[256,128], index: 0, kind: input, shape index: {}]
  %s1 = inlined_call_operand.hbm [shape: bf16[128,128], index: 1, kind: input, shape index: {}]
  %s2 = inlined_call_operand.vmem [shape: f32[1,128], index: 2, kind: input, shape index: {}]
  %s3 = inlined_call_operand.hbm [shape: bf16[128,128], index: 3, kind: input, shape index: {}]
  %s4 = inlined_call_operand.vmem [shape: f32[1,128], index: 4, kind: input, shape index: {}]
  %s5 = inlined_call_operand.hbm [shape: bf16[128,128], index: 5, kind: input, shape index: {}]
  %s6 = inlined_call_operand.vmem [shape: f32[1,128], index: 6, kind: input, shape index: {}]
  %s7 = inlined_call_operand.hbm [shape: bf16[128,512], index: 7, kind: input, shape index: {}]
  %s8 = inlined_call_operand.vmem [shape: f32[1,512], index: 8, kind: input, shape index: {}]
  %s9 = inlined_call_operand.hbm [shape: f32[256,256], index: 9, kind: output, shape index: {0}]
  %s10 = inlined_call_operand.hbm [shape: f32[256,256], index: 10, kind: output, shape index: {1}]
  %11 = xla_tuple %s9, %s10
  %s12 = sld [smem:[#allocation0]]
  $region97: #{tpu_custom_call.1} parent=0
    _
  %s14 = ssub.s32 1, %s12
  %s15 = scalar_select 0, %s14, %s12
  $region1: #{tpu_custom_call.1} parent=0
    #allocation2 [shape = 'u8[131072]{0}', space=vmem, size = 0x20000, scoped, tag = 'input window, operand 0']
    #allocation3 [shape = 's32[2]{0}', space=sflag, size = 0x8, scoped, tag = 'scoped memory for tpu_custom_call.1']
    #allocation4 [shape = 's32[2]{0}', space=sflag, size = 0x8, scoped, tag = 'scoped memory for tpu_custom_call.1']
    #allocation5 [shape = 'u8[32768]{0}', space=vmem, size = 0x8000, scoped, tag = 'input window, operand 1, single buffered']
    #allocation6 [shape = 's32[1]{0}', space=sflag, size = 0x4, scoped, tag = 'scoped memory for tpu_custom_call.1']
    #allocation7 [shape = 'u8[32768]{0}', space=vmem, size = 0x8000, scoped, tag = 'input window, operand 3, single buffered']
    #allocation8 [shape = 'u8[32768]{0}', space=vmem, size = 0x8000, scoped, tag = 'input window, operand 5, single buffered']
    #allocation9 [shape = 's32[1]{0}', space=sflag, size = 0x4, scoped, tag = 'scoped memory for tpu_custom_call.1']
    #allocation10 [shape = 'u8[131072]{0}', space=vmem, size = 0x20000, scoped, tag = 'input window, operand 7, single buffered']
    #allocation11 [shape = 'u8[262144]{0}', space=vmem, size = 0x40000, scoped, tag = 'output window, operand 0']
    #allocation12 [shape = 'u8[262144]{0}', space=vmem, size = 0x40000, scoped, tag = 'output window, operand 1']
    #allocation13 [shape = 's32[2]{0}', space=sflag, size = 0x8, scoped, tag = 'scoped memory for tpu_custom_call.1']
    %16 = vsyncpa [#allocation3], 0
    %s17 = scalar_lea.sflag [#allocation3], 1
    %18 = vsyncpa %s17, 0
    %19 = vsyncpa [#allocation6], 0
    %20 = vsyncpa [#allocation9], 0
    %21 = vsyncpa [#allocation4], 0
    %s22 = scalar_lea.sflag [#allocation4], 1
    %23 = vsyncpa %s22, 0
    %24 = vsyncpa [#allocation13], 0
    %s25 = scalar_lea.sflag [#allocation13], 1
    %26 = vsyncpa %s25, 0
    loop: start=0, step=1, limit=4
    $region2: #{tpu_custom_call.1} parent=1 // loop_pre_header
      _
    $region3: #{tpu_custom_call.1} parent=1 // loop_header
      %s28 = sphi 0, %s32
      %p29 = scmp.ge.s32.totalorder %s28, 4
      %s38 = sphi 0, %s40
      %s41 = sphi 0, %s38
      %s42 = sphi 0, %s41
      %s58 = sphi 0, %s42
      %s62 = sphi 0, %s62
      %s64 = sphi 0, %s62
      %s65 = sphi 0, %s64
      %s79 = sphi 0, %s65
      %s83 = sphi 0, %s83
      %s85 = sphi 0, %s83
      %s86 = sphi 0, %s85
      %s100 = sphi 0, %s86
      %s104 = sphi 0, %s104
      %s106 = sphi 0, %s104
      %s107 = sphi 0, %s106
      %s121 = sphi 0, %s107
      %s125 = sphi 0, %s125
      %s127 = sphi 0, %s125
      %s128 = sphi 0, %s127
      %s142 = sphi 0, %s128
      %s146 = sphi 0, %s146
      %s148 = sphi 0, %s146
      %s149 = sphi 0, %s148
      %s163 = sphi 0, %s149
      %s167 = sphi 0, %s167
      %s169 = sphi 0, %s167
      %s170 = sphi 0, %s169
      %s184 = sphi 0, %s170
      %s188 = sphi 0, %s188
      %s190 = sphi 0, %s188
      %s191 = sphi 0, %s190
      %s205 = sphi 0, %s191
      %s209 = sphi 0, %s209
      %s211 = sphi 0, %s209
      %s212 = sphi 0, %s211
      %s226 = sphi 0, %s212
      %s232 = sphi 0, %s234
      %s235 = sphi 0, %s232
      %s236 = sphi 0, %s235
      %s252 = sphi 0, %s236
      %s258 = sphi 0, %s260
      %s261 = sphi 0, %s258
      %s262 = sphi 0, %s261
      %s278 = sphi 0, %s262
    $region4: #{tpu_custom_call.1} parent=1 // loop_header_branch
      %31 = sbr.rel (%p29) target = $region8
    $region5: #{tpu_custom_call.1} parent=1 // loop_body
      %s33 = ssub.s32 %s28, 1
      %s34 = ssub.s32 %s28, 2
      %s35 = sadd.s32 %s28, 1
      %s36 = ssub.s32 %s28, %s35
      %p37 = scmp.eq.s32.totalorder %s36, 0
      %s39 = sadd.s32 %s38, 1
      %s40 = scalar_select %p37, %s38, %s39
      %p43 = pneg %p37
      %p44 = scmp.eq.s32.totalorder %s28, 1
      %p45 = por %p43, %p44
      %p46 = scmp.ne.s32.totalorder %s38, %s41
      %p47 = scmp.eq.s32.totalorder %s28, 0
      %p48 = por %p46, %p47
      %p49 = scmp.ne.s32.totalorder %s38, %s41
      %p50 = scmp.eq.s32.totalorder %s33, 1
      %p51 = por %p49, %p50
      %p52 = scmp.ne.s32.totalorder %s41, %s42
      %p53 = scmp.eq.s32.totalorder %s33, 0
      %p54 = por %p52, %p53
      %p55 = scmp.ne.s32.totalorder %s41, %s42
      %p56 = scmp.eq.s32.totalorder %s34, 1
      %p57 = por %p55, %p56
      %p59 = scmp.ne.s32.totalorder %s42, %s58
      %p60 = scmp.eq.s32.totalorder %s34, 0
      %p61 = por %p59, %p60
      %s63 = sadd.s32 %s62, 1
      %p66 = scmp.eq.s32.totalorder %s28, 1
      %p67 = scmp.ne.s32.totalorder %s62, %s64
      %p68 = scmp.eq.s32.totalorder %s28, 0
      %p69 = por %p67, %p68
      %p70 = scmp.ne.s32.totalorder %s62, %s64
      %p71 = scmp.eq.s32.totalorder %s33, 1
      %p72 = por %p70, %p71
      %p73 = scmp.ne.s32.totalorder %s64, %s65
      %p74 = scmp.eq.s32.totalorder %s33, 0
      %p75 = por %p73, %p74
      %p76 = scmp.ne.s32.totalorder %s64, %s65
      %p77 = scmp.eq.s32.totalorder %s34, 1
      %p78 = por %p76, %p77
      %p80 = scmp.ne.s32.totalorder %s65, %s79
      %p81 = scmp.eq.s32.totalorder %s34, 0
      %p82 = por %p80, %p81
      %s84 = sadd.s32 %s83, 1
      %p87 = scmp.eq.s32.totalorder %s28, 1
      %p88 = scmp.ne.s32.totalorder %s83, %s85
      %p89 = scmp.eq.s32.totalorder %s28, 0
      %p90 = por %p88, %p89
      %p91 = scmp.ne.s32.totalorder %s83, %s85
      %p92 = scmp.eq.s32.totalorder %s33, 1
      %p93 = por %p91, %p92
      %p94 = scmp.ne.s32.totalorder %s85, %s86
      %p95 = scmp.eq.s32.totalorder %s33, 0
      %p96 = por %p94, %p95
      %p97 = scmp.ne.s32.totalorder %s85, %s86
      %p98 = scmp.eq.s32.totalorder %s34, 1
      %p99 = por %p97, %p98
      %p101 = scmp.ne.s32.totalorder %s86, %s100
      %p102 = scmp.eq.s32.totalorder %s34, 0
      %p103 = por %p101, %p102
      %s105 = sadd.s32 %s104, 1
      %p108 = scmp.eq.s32.totalorder %s28, 1
      %p109 = scmp.ne.s32.totalorder %s104, %s106
      %p110 = scmp.eq.s32.totalorder %s28, 0
      %p111 = por %p109, %p110
      %p112 = scmp.ne.s32.totalorder %s104, %s106
      %p113 = scmp.eq.s32.totalorder %s33, 1
      %p114 = por %p112, %p113
      %p115 = scmp.ne.s32.totalorder %s106, %s107
      %p116 = scmp.eq.s32.totalorder %s33, 0
      %p117 = por %p115, %p116
      %p118 = scmp.ne.s32.totalorder %s106, %s107
      %p119 = scmp.eq.s32.totalorder %s34, 1
      %p120 = por %p118, %p119
      %p122 = scmp.ne.s32.totalorder %s107, %s121
      %p123 = scmp.eq.s32.totalorder %s34, 0
      %p124 = por %p122, %p123
      %s126 = sadd.s32 %s125, 1
      %p129 = scmp.eq.s32.totalorder %s28, 1
      %p130 = scmp.ne.s32.totalorder %s125, %s127
      %p131 = scmp.eq.s32.totalorder %s28, 0
      %p132 = por %p130, %p131
      %p133 = scmp.ne.s32.totalorder %s125, %s127
      %p134 = scmp.eq.s32.totalorder %s33, 1
      %p135 = por %p133, %p134
      %p136 = scmp.ne.s32.totalorder %s127, %s128
      %p137 = scmp.eq.s32.totalorder %s33, 0
      %p138 = por %p136, %p137
      %p139 = scmp.ne.s32.totalorder %s127, %s128
      %p140 = scmp.eq.s32.totalorder %s34, 1
      %p141 = por %p139, %p140
      %p143 = scmp.ne.s32.totalorder %s128, %s142
      %p144 = scmp.eq.s32.totalorder %s34, 0
      %p145 = por %p143, %p144
      %s147 = sadd.s32 %s146, 1
      %p150 = scmp.eq.s32.totalorder %s28, 1
      %p151 = scmp.ne.s32.totalorder %s146, %s148
      %p152 = scmp.eq.s32.totalorder %s28, 0
      %p153 = por %p151, %p152
      %p154 = scmp.ne.s32.totalorder %s146, %s148
      %p155 = scmp.eq.s32.totalorder %s33, 1
      %p156 = por %p154, %p155
      %p157 = scmp.ne.s32.totalorder %s148, %s149
      %p158 = scmp.eq.s32.totalorder %s33, 0
      %p159 = por %p157, %p158
      %p160 = scmp.ne.s32.totalorder %s148, %s149
      %p161 = scmp.eq.s32.totalorder %s34, 1
      %p162 = por %p160, %p161
      %p164 = scmp.ne.s32.totalorder %s149, %s163
      %p165 = scmp.eq.s32.totalorder %s34, 0
      %p166 = por %p164, %p165
      %s168 = sadd.s32 %s167, 1
      %p171 = scmp.eq.s32.totalorder %s28, 1
      %p172 = scmp.ne.s32.totalorder %s167, %s169
      %p173 = scmp.eq.s32.totalorder %s28, 0
      %p174 = por %p172, %p173
      %p175 = scmp.ne.s32.totalorder %s167, %s169
      %p176 = scmp.eq.s32.totalorder %s33, 1
      %p177 = por %p175, %p176
      %p178 = scmp.ne.s32.totalorder %s169, %s170
      %p179 = scmp.eq.s32.totalorder %s33, 0
      %p180 = por %p178, %p179
      %p181 = scmp.ne.s32.totalorder %s169, %s170
      %p182 = scmp.eq.s32.totalorder %s34, 1
      %p183 = por %p181, %p182
      %p185 = scmp.ne.s32.totalorder %s170, %s184
      %p186 = scmp.eq.s32.totalorder %s34, 0
      %p187 = por %p185, %p186
      %s189 = sadd.s32 %s188, 1
      %p192 = scmp.eq.s32.totalorder %s28, 1
      %p193 = scmp.ne.s32.totalorder %s188, %s190
      %p194 = scmp.eq.s32.totalorder %s28, 0
      %p195 = por %p193, %p194
      %p196 = scmp.ne.s32.totalorder %s188, %s190
      %p197 = scmp.eq.s32.totalorder %s33, 1
      %p198 = por %p196, %p197
      %p199 = scmp.ne.s32.totalorder %s190, %s191
      %p200 = scmp.eq.s32.totalorder %s33, 0
      %p201 = por %p199, %p200
      %p202 = scmp.ne.s32.totalorder %s190, %s191
      %p203 = scmp.eq.s32.totalorder %s34, 1
      %p204 = por %p202, %p203
      %p206 = scmp.ne.s32.totalorder %s191, %s205
      %p207 = scmp.eq.s32.totalorder %s34, 0
      %p208 = por %p206, %p207
      %s210 = sadd.s32 %s209, 1
      %p213 = scmp.eq.s32.totalorder %s28, 1
      %p214 = scmp.ne.s32.totalorder %s209, %s211
      %p215 = scmp.eq.s32.totalorder %s28, 0
      %p216 = por %p214, %p215
      %p217 = scmp.ne.s32.totalorder %s209, %s211
      %p218 = scmp.eq.s32.totalorder %s33, 1
      %p219 = por %p217, %p218
      %p220 = scmp.ne.s32.totalorder %s211, %s212
      %p221 = scmp.eq.s32.totalorder %s33, 0
      %p222 = por %p220, %p221
      %p223 = scmp.ne.s32.totalorder %s211, %s212
      %p224 = scmp.eq.s32.totalorder %s34, 1
      %p225 = por %p223, %p224
      %p227 = scmp.ne.s32.totalorder %s212, %s226
      %p228 = scmp.eq.s32.totalorder %s34, 0
      %p229 = por %p227, %p228
      %s230 = ssub.s32 %s28, %s35
      %p231 = scmp.eq.s32.totalorder %s230, 0
      %s233 = sadd.s32 %s232, 1
      %s234 = scalar_select %p231, %s232, %s233
      %p237 = pneg %p231
      %p238 = scmp.eq.s32.totalorder %s28, 1
      %p239 = por %p237, %p238
      %p240 = scmp.ne.s32.totalorder %s232, %s235
      %p241 = scmp.eq.s32.totalorder %s28, 0
      %p242 = por %p240, %p241
      %p243 = scmp.ne.s32.totalorder %s232, %s235
      %p244 = scmp.eq.s32.totalorder %s33, 1
      %p245 = por %p243, %p244
      %p246 = scmp.ne.s32.totalorder %s235, %s236
      %p247 = scmp.eq.s32.totalorder %s33, 0
      %p248 = por %p246, %p247
      %p249 = scmp.ne.s32.totalorder %s235, %s236
      %p250 = scmp.eq.s32.totalorder %s34, 1
      %p251 = por %p249, %p250
      %p253 = scmp.ne.s32.totalorder %s236, %s252
      %p254 = scmp.eq.s32.totalorder %s34, 0
      %p255 = por %p253, %p254
      %s256 = ssub.s32 %s28, %s35
      %p257 = scmp.eq.s32.totalorder %s256, 0
      %s259 = sadd.s32 %s258, 1
      %s260 = scalar_select %p257, %s258, %s259
      %p263 = pneg %p257
      %p264 = scmp.eq.s32.totalorder %s28, 1
      %p265 = por %p263, %p264
      %p266 = scmp.ne.s32.totalorder %s258, %s261
      %p267 = scmp.eq.s32.totalorder %s28, 0
      %p268 = por %p266, %p267
      %p269 = scmp.ne.s32.totalorder %s258, %s261
      %p270 = scmp.eq.s32.totalorder %s33, 1
      %p271 = por %p269, %p270
      %p272 = scmp.ne.s32.totalorder %s261, %s262
      %p273 = scmp.eq.s32.totalorder %s33, 0
      %p274 = por %p272, %p273
      %p275 = scmp.ne.s32.totalorder %s261, %s262
      %p276 = scmp.eq.s32.totalorder %s34, 1
      %p277 = por %p275, %p276
      %p279 = scmp.ne.s32.totalorder %s262, %s278
      %p280 = scmp.eq.s32.totalorder %s34, 0
      %p281 = por %p279, %p280
      %p282 = scmp.le.s32.totalorder 1, %s28
      %p283 = scmp.lt.s32.totalorder %s28, 3
      %p284 = pnand %p282, %p283
      %p285 = pneg %p284
      // Predicated region
      $region9: #{tpu_custom_call.1} parent=5 // pred_check
        _
      $region10: #{tpu_custom_call.1} parent=5 // pred_check_branch
        %287 = sbr.rel (%p284) target = $region12
      $region11: #{tpu_custom_call.1} parent=5 // pred_region
        %s288 = ssub.s32 %s28, 1
        // Predicated region
        $region13: #{tpu_custom_call.1} parent=11 // pred_check
          %p289 = pneg %p75
        $region14: #{tpu_custom_call.1} parent=11 // pred_check_branch
          %291 = sbr.rel (%p289) target = $region16
        $region15: #{tpu_custom_call.1} parent=11 // pred_region
          %s293 = ssub.s32 1024, 1024
          %294 = vsyncadd [#allocation6], %s293
          %s295 = sshll.u32 [#allocation5], 4
          %s296 = int_to_ptr.vmem [resolvable:$true] %s295
          %301 = dma.hbm_to_vmem [thread:$0]  %s1, 1024, %s296, [#allocation6], 64, 64, 4
        $region16: #{tpu_custom_call.1} parent=11 // pred_fallthru
          _
        // Predicated region
        $region17: #{tpu_custom_call.1} parent=11 // pred_check
          %p302 = pneg %p96
        $region18: #{tpu_custom_call.1} parent=11 // pred_check_branch
          %304 = sbr.rel (%p302) target = $region20
        $region19: #{tpu_custom_call.1} parent=11 // pred_region
          _
        $region20: #{tpu_custom_call.1} parent=11 // pred_fallthru
          _
        // Predicated region
        $region21: #{tpu_custom_call.1} parent=11 // pred_check
          %p305 = pneg %p117
        $region22: #{tpu_custom_call.1} parent=11 // pred_check_branch
          %307 = sbr.rel (%p305) target = $region24
        $region23: #{tpu_custom_call.1} parent=11 // pred_region
          %s309 = ssub.s32 1024, 1024
          %310 = vsyncadd [#allocation6], %s309
          %s311 = sshll.u32 [#allocation7], 4
          %s312 = int_to_ptr.vmem [resolvable:$true] %s311
          %317 = dma.hbm_to_vmem [thread:$0]  %s3, 1024, %s312, [#allocation6], 64, 64, 4
        $region24: #{tpu_custom_call.1} parent=11 // pred_fallthru
          _
        // Predicated region
        $region25: #{tpu_custom_call.1} parent=11 // pred_check
          %p318 = pneg %p138
        $region26: #{tpu_custom_call.1} parent=11 // pred_check_branch
          %320 = sbr.rel (%p318) target = $region28
        $region27: #{tpu_custom_call.1} parent=11 // pred_region
          _
        $region28: #{tpu_custom_call.1} parent=11 // pred_fallthru
          _
        // Predicated region
        $region29: #{tpu_custom_call.1} parent=11 // pred_check
          %p321 = pneg %p159
        $region30: #{tpu_custom_call.1} parent=11 // pred_check_branch
          %323 = sbr.rel (%p321) target = $region32
        $region31: #{tpu_custom_call.1} parent=11 // pred_region
          %s325 = ssub.s32 1024, 1024
          %326 = vsyncadd [#allocation9], %s325
          %s327 = sshll.u32 [#allocation8], 4
          %s328 = int_to_ptr.vmem [resolvable:$true] %s327
          %333 = dma.hbm_to_vmem [thread:$0]  %s5, 1024, %s328, [#allocation9], 64, 64, 4
        $region32: #{tpu_custom_call.1} parent=11 // pred_fallthru
          _
        // Predicated region
        $region33: #{tpu_custom_call.1} parent=11 // pred_check
          %p334 = pneg %p180
        $region34: #{tpu_custom_call.1} parent=11 // pred_check_branch
          %336 = sbr.rel (%p334) target = $region36
        $region35: #{tpu_custom_call.1} parent=11 // pred_region
          _
        $region36: #{tpu_custom_call.1} parent=11 // pred_fallthru
          _
        // Predicated region
        $region37: #{tpu_custom_call.1} parent=11 // pred_check
          %p337 = pneg %p201
        $region38: #{tpu_custom_call.1} parent=11 // pred_check_branch
          %339 = sbr.rel (%p337) target = $region40
        $region39: #{tpu_custom_call.1} parent=11 // pred_region
          %s341 = ssub.s32 4096, 4096
          %342 = vsyncadd [#allocation9], %s341
          %s343 = sshll.u32 [#allocation10], 4
          %s344 = int_to_ptr.vmem [resolvable:$true] %s343
          %349 = dma.hbm_to_vmem [thread:$0]  %s7, 4096, %s344, [#allocation9], 256, 256, 16
        $region40: #{tpu_custom_call.1} parent=11 // pred_fallthru
          _
        // Predicated region
        $region41: #{tpu_custom_call.1} parent=11 // pred_check
          %p350 = pneg %p222
        $region42: #{tpu_custom_call.1} parent=11 // pred_check_branch
          %352 = sbr.rel (%p350) target = $region44
        $region43: #{tpu_custom_call.1} parent=11 // pred_region
          _
        $region44: #{tpu_custom_call.1} parent=11 // pred_fallthru
          _
      $region12: #{tpu_custom_call.1} parent=5 // pred_fallthru
        _
      %p353 = scmp.lt.s32.totalorder %s28, 2
      // Predicated region
      $region45: #{tpu_custom_call.1} parent=5 // pred_check
        %p354 = pneg %p353
      $region46: #{tpu_custom_call.1} parent=5 // pred_check_branch
        %356 = sbr.rel (%p354) target = $region48
      $region47: #{tpu_custom_call.1} parent=5 // pred_region
        // Predicated region
        $region49: #{tpu_custom_call.1} parent=47 // pred_check
          %p357 = pneg %p48
        $region50: #{tpu_custom_call.1} parent=47 // pred_check_branch
          %359 = sbr.rel (%p357) target = $region52
        $region51: #{tpu_custom_call.1} parent=47 // pred_region
          %s360 = sand.u32 %s38, 1
          %s361 = scalar_lea.sflag [#allocation3], %s360
          %s362 = sand.u32 %s38, 1
          %s363 = smul.addr %s362, 128
          %s364 = scalar_lea.vmem [#allocation2], %s363
          %s365 = smul.u32 16, %s28
          %s367 = ssub.s32 2048, 2048
          %368 = vsyncadd %s361, %s367
          %s369 = smul.addr %s365, 128
          %s370 = scalar_lea.hbm %s0, %s369
          %s371 = sshll.u32 %s364, 4
          %s372 = int_to_ptr.vmem [resolvable:$true] %s371
          %377 = dma.hbm_to_vmem [thread:$0]  %s370, 2048, %s372, %s361, 128, 128, 8
        $region52: #{tpu_custom_call.1} parent=47 // pred_fallthru
          _
      $region48: #{tpu_custom_call.1} parent=5 // pred_fallthru
        _
      %p378 = scmp.le.s32.totalorder 1, %s28
      %p379 = scmp.lt.s32.totalorder %s28, 3
      %p380 = pnand %p378, %p379
      %p381 = pneg %p380
      // Predicated region
      $region53: #{tpu_custom_call.1} parent=5 // pred_check
        _
      $region54: #{tpu_custom_call.1} parent=5 // pred_check_branch
        %383 = sbr.rel (%p380) target = $region56
      $region55: #{tpu_custom_call.1} parent=5 // pred_region
        %s384 = ssub.s32 %s28, 1
        %s385 = sand.u32 %s41, 1
        %s386 = scalar_lea.sflag [#allocation3], %s385
        %s387 = sand.u32 %s41, 1
        %s388 = smul.addr %s387, 128
        %s389 = scalar_lea.vmem [#allocation2], %s388
        // Predicated region
        $region57: #{tpu_custom_call.1} parent=55 // pred_check
          %p390 = pneg %p54
        $region58: #{tpu_custom_call.1} parent=55 // pred_check_branch
          %392 = sbr.rel (%p390) target = $region60
        $region59: #{tpu_custom_call.1} parent=55 // pred_region
          %393 = dma.done %s386, 2048
        $region60: #{tpu_custom_call.1} parent=55 // pred_fallthru
          _
        // Predicated region
        $region61: #{tpu_custom_call.1} parent=55 // pred_check
          %p394 = pneg %p75
        $region62: #{tpu_custom_call.1} parent=55 // pred_check_branch
          %396 = sbr.rel (%p394) target = $region64
        $region63: #{tpu_custom_call.1} parent=55 // pred_region
          %397 = dma.done [#allocation6], 1024
        $region64: #{tpu_custom_call.1} parent=55 // pred_fallthru
          _
        // Predicated region
        $region65: #{tpu_custom_call.1} parent=55 // pred_check
          %p398 = pneg %p117
        $region66: #{tpu_custom_call.1} parent=55 // pred_check_branch
          %400 = sbr.rel (%p398) target = $region68
        $region67: #{tpu_custom_call.1} parent=55 // pred_region
          %401 = dma.done [#allocation6], 1024
        $region68: #{tpu_custom_call.1} parent=55 // pred_fallthru
          _
        // Predicated region
        $region69: #{tpu_custom_call.1} parent=55 // pred_check
          %p402 = pneg %p159
        $region70: #{tpu_custom_call.1} parent=55 // pred_check_branch
          %404 = sbr.rel (%p402) target = $region72
        $region71: #{tpu_custom_call.1} parent=55 // pred_region
          %405 = dma.done [#allocation9], 1024
        $region72: #{tpu_custom_call.1} parent=55 // pred_fallthru
          _
        // Predicated region
        $region73: #{tpu_custom_call.1} parent=55 // pred_check
          %p406 = pneg %p201
        $region74: #{tpu_custom_call.1} parent=55 // pred_check_branch
          %408 = sbr.rel (%p406) target = $region76
        $region75: #{tpu_custom_call.1} parent=55 // pred_region
          %409 = dma.done [#allocation9], 4096
        $region76: #{tpu_custom_call.1} parent=55 // pred_fallthru
          _
        %s410 = sand.u32 %s41, 1
        %s411 = scalar_lea.sflag [#allocation3], %s410
        %s412 = sand.u32 %s41, 1
        %s413 = smul.addr %s412, 128
        %s414 = scalar_lea.vmem [#allocation2], %s413
        %p415 = pneg %p54
        %p416 = pneg %p51
        %p417 = pneg %p75
        %p418 = pneg %p72
        %p419 = pneg %p96
        %p420 = pneg %p93
        %p421 = pneg %p117
        %p422 = pneg %p114
        %p423 = pneg %p138
        %p424 = pneg %p135
        %p425 = pneg %p159
        %p426 = pneg %p156
        %p427 = pneg %p180
        %p428 = pneg %p177
        %p429 = pneg %p201
        %p430 = pneg %p198
        %p431 = pneg %p222
        %p432 = pneg %p219
        %p433 = pneg %p248
        %p434 = pneg %p245
        %s435 = sand.u32 %s235, 1
        %s436 = scalar_lea.sflag [#allocation4], %s435
        %s437 = sand.u32 %s235, 1
        %s438 = smul.addr %s437, 256
        %s439 = scalar_lea.vmem [#allocation11], %s438
        %p440 = pneg %p274
        %p441 = pneg %p271
        %s442 = sand.u32 %s261, 1
        %s443 = scalar_lea.sflag [#allocation13], %s442
        %s444 = sand.u32 %s261, 1
        %s445 = smul.addr %s444, 256
        %s446 = scalar_lea.vmem [#allocation12], %s445
        %s447 = smul.u32 16, %s33
        %s448 = smul.u32 16, %s33
        %s449 = smul.u32 16, %s33
        %v451 = vld [vmem:[%s389] sm:$0xff]
        %v452 = vld [vmem:[%s389 + $0x8] sm:$0xff]
        %v453 = vld [vmem:[%s389 + $0x10] sm:$0xff]
        %v454 = vld [vmem:[%s389 + $0x18] sm:$0xff]
        %v455 = vld [vmem:[%s389 + $0x20] sm:$0xff]
        %v456 = vld [vmem:[%s389 + $0x28] sm:$0xff]
        %v457 = vld [vmem:[%s389 + $0x30] sm:$0xff]
        %v458 = vld [vmem:[%s389 + $0x38] sm:$0xff]
        %v459 = vld [vmem:[%s389 + $0x40] sm:$0xff]
        %v460 = vld [vmem:[%s389 + $0x48] sm:$0xff]
        %v461 = vld [vmem:[%s389 + $0x50] sm:$0xff]
        %v462 = vld [vmem:[%s389 + $0x58] sm:$0xff]
        %v463 = vld [vmem:[%s389 + $0x60] sm:$0xff]
        %v464 = vld [vmem:[%s389 + $0x68] sm:$0xff]
        %v465 = vld [vmem:[%s389 + $0x70] sm:$0xff]
        %v466 = vld [vmem:[%s389 + $0x78] sm:$0xff]
        %v467 = vpack.c.bf16 %v452, %v451
        %v468 = vpack.c.bf16 %v454, %v453
        %v469 = vpack.c.bf16 %v456, %v455
        %v470 = vpack.c.bf16 %v458, %v457
        %v471 = vpack.c.bf16 %v460, %v459
        %v472 = vpack.c.bf16 %v462, %v461
        %v473 = vpack.c.bf16 %v464, %v463
        %v474 = vpack.c.bf16 %v466, %v465
        %v475 = vld [vmem:[#allocation5] sm:$0xf]
        %v476 = vld [vmem:[#allocation5 + $0x4] sm:$0xf]
        %v477 = vld [vmem:[#allocation5 + $0x8] sm:$0xf]
        %v478 = vld [vmem:[#allocation5 + $0xc] sm:$0xf]
        %v479 = vld [vmem:[#allocation5 + $0x10] sm:$0xf]
        %v480 = vld [vmem:[#allocation5 + $0x14] sm:$0xf]
        %v481 = vld [vmem:[#allocation5 + $0x18] sm:$0xf]
        %v482 = vld [vmem:[#allocation5 + $0x1c] sm:$0xf]
        %v483 = vld [vmem:[#allocation5 + $0x20] sm:$0xf]
        %v484 = vld [vmem:[#allocation5 + $0x24] sm:$0xf]
        %v485 = vld [vmem:[#allocation5 + $0x28] sm:$0xf]
        %v486 = vld [vmem:[#allocation5 + $0x2c] sm:$0xf]
        %v487 = vld [vmem:[#allocation5 + $0x30] sm:$0xf]
        %v488 = vld [vmem:[#allocation5 + $0x34] sm:$0xf]
        %v489 = vld [vmem:[#allocation5 + $0x38] sm:$0xf]
        %v490 = vld [vmem:[#allocation5 + $0x3c] sm:$0xf]
        %v491 = vld [vmem:[%s2] sm:$0x1]
        %v493 = vlaneseq
        %v494 = vshrl.u32 %v493, 7
        %v495 = vsub.s32 0, %v494
        %v496 = vrot.slane %v491, %v495
        %v514 = vunpack.c.l.b16 %v475
        %v515 = vunpack.c.l.b16 %v476
        %v516 = vunpack.c.l.b16 %v477
        %v517 = vunpack.c.l.b16 %v478
        %v518 = vunpack.c.l.b16 %v479
        %v519 = vunpack.c.l.b16 %v480
        %v520 = vunpack.c.l.b16 %v481
        %v521 = vunpack.c.l.b16 %v482
        %v522 = vunpack.c.l.b16 %v483
        %v523 = vunpack.c.l.b16 %v484
        %v524 = vunpack.c.l.b16 %v485
        %v525 = vunpack.c.l.b16 %v486
        %v526 = vunpack.c.l.b16 %v487
        %v527 = vunpack.c.l.b16 %v488
        %v528 = vunpack.c.l.b16 %v489
        %v529 = vunpack.c.l.b16 %v490
        %v530 = vpack.c.b16 %v515, %v514
        %v531 = vpack.c.b16 %v517, %v516
        %v532 = vpack.c.b16 %v519, %v518
        %v533 = vpack.c.b16 %v521, %v520
        %v534 = vpack.c.b16 %v523, %v522
        %v535 = vpack.c.b16 %v525, %v524
        %v536 = vpack.c.b16 %v527, %v526
        %v537 = vpack.c.b16 %v529, %v528
        %546 = vmatprep.subr.bf16.mxu0 0
        %547 = vmatpush1.bf16.msra.mxu0 %v530
        %548 = vmatprep.subr.bf16.mxu0 0
        %549 = vmatpush1.bf16.msra.mxu0 %v531
        %550 = vmatprep.subr.bf16.mxu0 0
        %551 = vmatpush1.bf16.msra.mxu0 %v532
        %552 = vmatprep.subr.bf16.mxu0 0
        %553 = vmatpush1.bf16.msra.mxu0 %v533
        %554 = vmatprep.subr.bf16.mxu0 0
        %555 = vmatpush1.bf16.msra.mxu0 %v534
        %556 = vmatprep.subr.bf16.mxu0 0
        %557 = vmatpush1.bf16.msra.mxu0 %v535
        %558 = vmatprep.subr.bf16.mxu0 0
        %559 = vmatpush1.bf16.msra.mxu0 %v536
        %560 = vmatprep.subr.bf16.mxu0 0
        %561 = vmatpush1.bf16.msra.mxu0 %v537
        %562 = vmatprep.subr.bf16.mxu0 0
        %563 = vmatpush1.bf16.msra.mxu0 0
        %564 = vmatprep.subr.bf16.mxu0 0
        %565 = vmatpush1.bf16.msra.mxu0 0
        %566 = vmatprep.subr.bf16.mxu0 0
        %567 = vmatpush1.bf16.msra.mxu0 0
        %568 = vmatprep.subr.bf16.mxu0 0
        %569 = vmatpush1.bf16.msra.mxu0 0
        %570 = vmatprep.subr.bf16.mxu0 0
        %571 = vmatpush1.bf16.msra.mxu0 0
        %572 = vmatprep.subr.bf16.mxu0 0
        %573 = vmatpush1.bf16.msra.mxu0 0
        %574 = vmatprep.subr.bf16.mxu0 0
        %575 = vmatpush1.bf16.msra.mxu0 0
        %576 = vmatprep.subr.bf16.mxu0 0
        %577 = vmatpush1.bf16.msra.mxu0 0
        %578 = vmatprep.mubr.bf16.mxu0 0
        %579 = vmatmul.mubr.bf16.gmra.mrb[0].mxu0 %v467
        %v580 = vpop.f32.mrb[0].mxu0
        %v581 = vadd.f32 %v496, %v580
        %v582 = vpop.f32.mrb[0].mxu0
        %v583 = vpop.f32.mrb[0].mxu0
        %v584 = vadd.f32 %v496, %v583
        %v585 = vpop.f32.mrb[0].mxu0
        %586 = vmatprep.mubr.bf16.mxu0 0
        %587 = vmatmul.mubr.bf16.gmra.mrb[0].mxu0 %v468
        %v588 = vpop.f32.mrb[0].mxu0
        %v589 = vadd.f32 %v496, %v588
        %v590 = vpop.f32.mrb[0].mxu0
        %v591 = vpop.f32.mrb[0].mxu0
        %v592 = vadd.f32 %v496, %v591
        %v593 = vpop.f32.mrb[0].mxu0
        %594 = vmatprep.mubr.bf16.mxu0 0
        %595 = vmatmul.mubr.bf16.gmra.mrb[0].mxu0 %v469
        %v596 = vpop.f32.mrb[0].mxu0
        %v597 = vadd.f32 %v496, %v596
        %v598 = vpop.f32.mrb[0].mxu0
        %v599 = vpop.f32.mrb[0].mxu0
        %v600 = vadd.f32 %v496, %v599
        %v601 = vpop.f32.mrb[0].mxu0
        %602 = vmatprep.mubr.bf16.mxu0 0
        %603 = vmatmul.mubr.bf16.gmra.mrb[0].mxu0 %v470
        %v604 = vpop.f32.mrb[0].mxu0
        %v605 = vadd.f32 %v496, %v604
        %v606 = vpop.f32.mrb[0].mxu0
        %v607 = vpop.f32.mrb[0].mxu0
        %v608 = vadd.f32 %v496, %v607
        %v609 = vpop.f32.mrb[0].mxu0
        %610 = vmatprep.mubr.bf16.mxu0 0
        %611 = vmatmul.mubr.bf16.gmra.mrb[0].mxu0 %v471
        %v612 = vpop.f32.mrb[0].mxu0
        %v613 = vadd.f32 %v496, %v612
        %v614 = vpop.f32.mrb[0].mxu0
        %v615 = vpop.f32.mrb[0].mxu0
        %v616 = vadd.f32 %v496, %v615
        %v617 = vpop.f32.mrb[0].mxu0
        %618 = vmatprep.mubr.bf16.mxu0 0
        %619 = vmatmul.mubr.bf16.gmra.mrb[0].mxu0 %v472
        %v620 = vpop.f32.mrb[0].mxu0
        %v621 = vadd.f32 %v496, %v620
        %v622 = vpop.f32.mrb[0].mxu0
        %v623 = vpop.f32.mrb[0].mxu0
        %v624 = vadd.f32 %v496, %v623
        %v625 = vpop.f32.mrb[0].mxu0
        %626 = vmatprep.mubr.bf16.mxu0 0
        %627 = vmatmul.mubr.bf16.gmra.mrb[0].mxu0 %v473
        %v628 = vpop.f32.mrb[0].mxu0
        %v629 = vadd.f32 %v496, %v628
        %v630 = vpop.f32.mrb[0].mxu0
        %v631 = vpop.f32.mrb[0].mxu0
        %v632 = vadd.f32 %v496, %v631
        %v633 = vpop.f32.mrb[0].mxu0
        %634 = vmatprep.mubr.bf16.mxu0 0
        %635 = vmatmul.mubr.bf16.gmra.mrb[0].mxu0 %v474
        %v636 = vpop.f32.mrb[0].mxu0
        %v637 = vadd.f32 %v496, %v636
        %v638 = vpop.f32.mrb[0].mxu0
        %v639 = vpop.f32.mrb[0].mxu0
        %v640 = vadd.f32 %v496, %v639
        %v641 = vpop.f32.mrb[0].mxu0
        %642 = vdwg.mxu0
        %v643 = vmax.f32 %v581, 0.0
        %v644 = vmax.f32 %v584, 0.0
        %v645 = vmax.f32 %v589, 0.0
        %v646 = vmax.f32 %v592, 0.0
        %v647 = vmax.f32 %v597, 0.0
        %v648 = vmax.f32 %v600, 0.0
        %v649 = vmax.f32 %v605, 0.0
        %v650 = vmax.f32 %v608, 0.0
        %v651 = vmax.f32 %v613, 0.0
        %v652 = vmax.f32 %v616, 0.0
        %v653 = vmax.f32 %v621, 0.0
        %v654 = vmax.f32 %v624, 0.0
        %v655 = vmax.f32 %v629, 0.0
        %v656 = vmax.f32 %v632, 0.0
        %v657 = vmax.f32 %v637, 0.0
        %v658 = vmax.f32 %v640, 0.0
        %v659 = vpack.c.bf16 %v644, %v643
        %v660 = vpack.c.bf16 %v646, %v645
        %v661 = vpack.c.bf16 %v648, %v647
        %v662 = vpack.c.bf16 %v650, %v649
        %v663 = vpack.c.bf16 %v652, %v651
        %v664 = vpack.c.bf16 %v654, %v653
        %v665 = vpack.c.bf16 %v656, %v655
        %v666 = vpack.c.bf16 %v658, %v657
        %v667 = vld [vmem:[#allocation7] sm:$0xf]
        %v668 = vld [vmem:[#allocation7 + $0x4] sm:$0xf]
        %v669 = vld [vmem:[#allocation7 + $0x8] sm:$0xf]
        %v670 = vld [vmem:[#allocation7 + $0xc] sm:$0xf]
        %v671 = vld [vmem:[#allocation7 + $0x10] sm:$0xf]
        %v672 = vld [vmem:[#allocation7 + $0x14] sm:$0xf]
        %v673 = vld [vmem:[#allocation7 + $0x18] sm:$0xf]
        %v674 = vld [vmem:[#allocation7 + $0x1c] sm:$0xf]
        %v675 = vld [vmem:[#allocation7 + $0x20] sm:$0xf]
        %v676 = vld [vmem:[#allocation7 + $0x24] sm:$0xf]
        %v677 = vld [vmem:[#allocation7 + $0x28] sm:$0xf]
        %v678 = vld [vmem:[#allocation7 + $0x2c] sm:$0xf]
        %v679 = vld [vmem:[#allocation7 + $0x30] sm:$0xf]
        %v680 = vld [vmem:[#allocation7 + $0x34] sm:$0xf]
        %v681 = vld [vmem:[#allocation7 + $0x38] sm:$0xf]
        %v682 = vld [vmem:[#allocation7 + $0x3c] sm:$0xf]
        %v683 = vld [vmem:[%s4] sm:$0x1]
        %v685 = vlaneseq
        %v686 = vshrl.u32 %v685, 7
        %v687 = vsub.s32 0, %v686
        %v688 = vrot.slane %v683, %v687
        %v706 = vunpack.c.l.b16 %v667
        %v707 = vunpack.c.l.b16 %v668
        %v708 = vunpack.c.l.b16 %v669
        %v709 = vunpack.c.l.b16 %v670
        %v710 = vunpack.c.l.b16 %v671
        %v711 = vunpack.c.l.b16 %v672
        %v712 = vunpack.c.l.b16 %v673
        %v713 = vunpack.c.l.b16 %v674
        %v714 = vunpack.c.l.b16 %v675
        %v715 = vunpack.c.l.b16 %v676
        %v716 = vunpack.c.l.b16 %v677
        %v717 = vunpack.c.l.b16 %v678
        %v718 = vunpack.c.l.b16 %v679
        %v719 = vunpack.c.l.b16 %v680
        %v720 = vunpack.c.l.b16 %v681
        %v721 = vunpack.c.l.b16 %v682
        %v722 = vpack.c.b16 %v707, %v706
        %v723 = vpack.c.b16 %v709, %v708
        %v724 = vpack.c.b16 %v711, %v710
        %v725 = vpack.c.b16 %v713, %v712
        %v726 = vpack.c.b16 %v715, %v714
        %v727 = vpack.c.b16 %v717, %v716
        %v728 = vpack.c.b16 %v719, %v718
        %v729 = vpack.c.b16 %v721, %v720
        %738 = vmatprep.subr.bf16.mxu0 0
        %739 = vmatpush1.bf16.msra.mxu0 %v722
        %740 = vmatprep.subr.bf16.mxu0 0
        %741 = vmatpush1.bf16.msra.mxu0 %v723
        %742 = vmatprep.subr.bf16.mxu0 0
        %743 = vmatpush1.bf16.msra.mxu0 %v724
        %744 = vmatprep.subr.bf16.mxu0 0
        %745 = vmatpush1.bf16.msra.mxu0 %v725
        %746 = vmatprep.subr.bf16.mxu0 0
        %747 = vmatpush1.bf16.msra.mxu0 %v726
        %748 = vmatprep.subr.bf16.mxu0 0
        %749 = vmatpush1.bf16.msra.mxu0 %v727
        %750 = vmatprep.subr.bf16.mxu0 0
        %751 = vmatpush1.bf16.msra.mxu0 %v728
        %752 = vmatprep.subr.bf16.mxu0 0
        %753 = vmatpush1.bf16.msra.mxu0 %v729
        %754 = vmatprep.subr.bf16.mxu0 0
        %755 = vmatpush1.bf16.msra.mxu0 0
        %756 = vmatprep.subr.bf16.mxu0 0
        %757 = vmatpush1.bf16.msra.mxu0 0
        %758 = vmatprep.subr.bf16.mxu0 0
        %759 = vmatpush1.bf16.msra.mxu0 0
        %760 = vmatprep.subr.bf16.mxu0 0
        %761 = vmatpush1.bf16.msra.mxu0 0
        %762 = vmatprep.subr.bf16.mxu0 0
        %763 = vmatpush1.bf16.msra.mxu0 0
        %764 = vmatprep.subr.bf16.mxu0 0
        %765 = vmatpush1.bf16.msra.mxu0 0
        %766 = vmatprep.subr.bf16.mxu0 0
        %767 = vmatpush1.bf16.msra.mxu0 0
        %768 = vmatprep.subr.bf16.mxu0 0
        %769 = vmatpush1.bf16.msra.mxu0 0
        %770 = vmatprep.mubr.bf16.mxu0 0
        %771 = vmatmul.mubr.bf16.gmra.mrb[0].mxu0 %v659
        %v772 = vpop.f32.mrb[0].mxu0
        %v773 = vadd.f32 %v688, %v772
        %v774 = vpop.f32.mrb[0].mxu0
        %v775 = vpop.f32.mrb[0].mxu0
        %v776 = vadd.f32 %v688, %v775
        %v777 = vpop.f32.mrb[0].mxu0
        %778 = vmatprep.mubr.bf16.mxu0 0
        %779 = vmatmul.mubr.bf16.gmra.mrb[0].mxu0 %v660
        %v780 = vpop.f32.mrb[0].mxu0
        %v781 = vadd.f32 %v688, %v780
        %v782 = vpop.f32.mrb[0].mxu0
        %v783 = vpop.f32.mrb[0].mxu0
        %v784 = vadd.f32 %v688, %v783
        %v785 = vpop.f32.mrb[0].mxu0
        %786 = vmatprep.mubr.bf16.mxu0 0
        %787 = vmatmul.mubr.bf16.gmra.mrb[0].mxu0 %v661
        %v788 = vpop.f32.mrb[0].mxu0
        %v789 = vadd.f32 %v688, %v788
        %v790 = vpop.f32.mrb[0].mxu0
        %v791 = vpop.f32.mrb[0].mxu0
        %v792 = vadd.f32 %v688, %v791
        %v793 = vpop.f32.mrb[0].mxu0
        %794 = vmatprep.mubr.bf16.mxu0 0
        %795 = vmatmul.mubr.bf16.gmra.mrb[0].mxu0 %v662
        %v796 = vpop.f32.mrb[0].mxu0
        %v797 = vadd.f32 %v688, %v796
        %v798 = vpop.f32.mrb[0].mxu0
        %v799 = vpop.f32.mrb[0].mxu0
        %v800 = vadd.f32 %v688, %v799
        %v801 = vpop.f32.mrb[0].mxu0
        %802 = vmatprep.mubr.bf16.mxu0 0
        %803 = vmatmul.mubr.bf16.gmra.mrb[0].mxu0 %v663
        %v804 = vpop.f32.mrb[0].mxu0
        %v805 = vadd.f32 %v688, %v804
        %v806 = vpop.f32.mrb[0].mxu0
        %v807 = vpop.f32.mrb[0].mxu0
        %v808 = vadd.f32 %v688, %v807
        %v809 = vpop.f32.mrb[0].mxu0
        %810 = vmatprep.mubr.bf16.mxu0 0
        %811 = vmatmul.mubr.bf16.gmra.mrb[0].mxu0 %v664
        %v812 = vpop.f32.mrb[0].mxu0
        %v813 = vadd.f32 %v688, %v812
        %v814 = vpop.f32.mrb[0].mxu0
        %v815 = vpop.f32.mrb[0].mxu0
        %v816 = vadd.f32 %v688, %v815
        %v817 = vpop.f32.mrb[0].mxu0
        %818 = vmatprep.mubr.bf16.mxu0 0
        %819 = vmatmul.mubr.bf16.gmra.mrb[0].mxu0 %v665
        %v820 = vpop.f32.mrb[0].mxu0
        %v821 = vadd.f32 %v688, %v820
        %v822 = vpop.f32.mrb[0].mxu0
        %v823 = vpop.f32.mrb[0].mxu0
        %v824 = vadd.f32 %v688, %v823
        %v825 = vpop.f32.mrb[0].mxu0
        %826 = vmatprep.mubr.bf16.mxu0 0
        %827 = vmatmul.mubr.bf16.gmra.mrb[0].mxu0 %v666
        %v828 = vpop.f32.mrb[0].mxu0
        %v829 = vadd.f32 %v688, %v828
        %v830 = vpop.f32.mrb[0].mxu0
        %v831 = vpop.f32.mrb[0].mxu0
        %v832 = vadd.f32 %v688, %v831
        %v833 = vpop.f32.mrb[0].mxu0
        %834 = vdwg.mxu0
        %v835 = vmax.f32 %v773, 0.0
        %v836 = vmax.f32 %v776, 0.0
        %v837 = vmax.f32 %v781, 0.0
        %v838 = vmax.f32 %v784, 0.0
        %v839 = vmax.f32 %v789, 0.0
        %v840 = vmax.f32 %v792, 0.0
        %v841 = vmax.f32 %v797, 0.0
        %v842 = vmax.f32 %v800, 0.0
        %v843 = vmax.f32 %v805, 0.0
        %v844 = vmax.f32 %v808, 0.0
        %v845 = vmax.f32 %v813, 0.0
        %v846 = vmax.f32 %v816, 0.0
        %v847 = vmax.f32 %v821, 0.0
        %v848 = vmax.f32 %v824, 0.0
        %v849 = vmax.f32 %v829, 0.0
        %v850 = vmax.f32 %v832, 0.0
        %v851 = vpack.c.bf16 %v836, %v835
        %v852 = vpack.c.bf16 %v838, %v837
        %v853 = vpack.c.bf16 %v840, %v839
        %v854 = vpack.c.bf16 %v842, %v841
        %v855 = vpack.c.bf16 %v844, %v843
        %v856 = vpack.c.bf16 %v846, %v845
        %v857 = vpack.c.bf16 %v848, %v847
        %v858 = vpack.c.bf16 %v850, %v849
        %v859 = vld [vmem:[#allocation8] sm:$0xf]
        %v860 = vld [vmem:[#allocation8 + $0x4] sm:$0xf]
        %v861 = vld [vmem:[#allocation8 + $0x8] sm:$0xf]
        %v862 = vld [vmem:[#allocation8 + $0xc] sm:$0xf]
        %v863 = vld [vmem:[#allocation8 + $0x10] sm:$0xf]
        %v864 = vld [vmem:[#allocation8 + $0x14] sm:$0xf]
        %v865 = vld [vmem:[#allocation8 + $0x18] sm:$0xf]
        %v866 = vld [vmem:[#allocation8 + $0x1c] sm:$0xf]
        %v867 = vld [vmem:[#allocation8 + $0x20] sm:$0xf]
        %v868 = vld [vmem:[#allocation8 + $0x24] sm:$0xf]
        %v869 = vld [vmem:[#allocation8 + $0x28] sm:$0xf]
        %v870 = vld [vmem:[#allocation8 + $0x2c] sm:$0xf]
        %v871 = vld [vmem:[#allocation8 + $0x30] sm:$0xf]
        %v872 = vld [vmem:[#allocation8 + $0x34] sm:$0xf]
        %v873 = vld [vmem:[#allocation8 + $0x38] sm:$0xf]
        %v874 = vld [vmem:[#allocation8 + $0x3c] sm:$0xf]
        %v875 = vld [vmem:[%s6] sm:$0x1]
        %v877 = vlaneseq
        %v878 = vshrl.u32 %v877, 7
        %v879 = vsub.s32 0, %v878
        %v880 = vrot.slane %v875, %v879
        %v898 = vunpack.c.l.b16 %v859
        %v899 = vunpack.c.l.b16 %v860
        %v900 = vunpack.c.l.b16 %v861
        %v901 = vunpack.c.l.b16 %v862
        %v902 = vunpack.c.l.b16 %v863
        %v903 = vunpack.c.l.b16 %v864
        %v904 = vunpack.c.l.b16 %v865
        %v905 = vunpack.c.l.b16 %v866
        %v906 = vunpack.c.l.b16 %v867
        %v907 = vunpack.c.l.b16 %v868
        %v908 = vunpack.c.l.b16 %v869
        %v909 = vunpack.c.l.b16 %v870
        %v910 = vunpack.c.l.b16 %v871
        %v911 = vunpack.c.l.b16 %v872
        %v912 = vunpack.c.l.b16 %v873
        %v913 = vunpack.c.l.b16 %v874
        %v914 = vpack.c.b16 %v899, %v898
        %v915 = vpack.c.b16 %v901, %v900
        %v916 = vpack.c.b16 %v903, %v902
        %v917 = vpack.c.b16 %v905, %v904
        %v918 = vpack.c.b16 %v907, %v906
        %v919 = vpack.c.b16 %v909, %v908
        %v920 = vpack.c.b16 %v911, %v910
        %v921 = vpack.c.b16 %v913, %v912
        %930 = vmatprep.subr.bf16.mxu0 0
        %931 = vmatpush1.bf16.msra.mxu0 %v914
        %932 = vmatprep.subr.bf16.mxu0 0
        %933 = vmatpush1.bf16.msra.mxu0 %v915
        %934 = vmatprep.subr.bf16.mxu0 0
        %935 = vmatpush1.bf16.msra.mxu0 %v916
        %936 = vmatprep.subr.bf16.mxu0 0
        %937 = vmatpush1.bf16.msra.mxu0 %v917
        %938 = vmatprep.subr.bf16.mxu0 0
        %939 = vmatpush1.bf16.msra.mxu0 %v918
        %940 = vmatprep.subr.bf16.mxu0 0
        %941 = vmatpush1.bf16.msra.mxu0 %v919
        %942 = vmatprep.subr.bf16.mxu0 0
        %943 = vmatpush1.bf16.msra.mxu0 %v920
        %944 = vmatprep.subr.bf16.mxu0 0
        %945 = vmatpush1.bf16.msra.mxu0 %v921
        %946 = vmatprep.subr.bf16.mxu0 0
        %947 = vmatpush1.bf16.msra.mxu0 0
        %948 = vmatprep.subr.bf16.mxu0 0
        %949 = vmatpush1.bf16.msra.mxu0 0
        %950 = vmatprep.subr.bf16.mxu0 0
        %951 = vmatpush1.bf16.msra.mxu0 0
        %952 = vmatprep.subr.bf16.mxu0 0
        %953 = vmatpush1.bf16.msra.mxu0 0
        %954 = vmatprep.subr.bf16.mxu0 0
        %955 = vmatpush1.bf16.msra.mxu0 0
        %956 = vmatprep.subr.bf16.mxu0 0
        %957 = vmatpush1.bf16.msra.mxu0 0
        %958 = vmatprep.subr.bf16.mxu0 0
        %959 = vmatpush1.bf16.msra.mxu0 0
        %960 = vmatprep.subr.bf16.mxu0 0
        %961 = vmatpush1.bf16.msra.mxu0 0
        %962 = vmatprep.mubr.bf16.mxu0 0
        %963 = vmatmul.mubr.bf16.gmra.mrb[0].mxu0 %v851
        %v964 = vpop.f32.mrb[0].mxu0
        %v965 = vadd.f32 %v880, %v964
        %v966 = vpop.f32.mrb[0].mxu0
        %v967 = vpop.f32.mrb[0].mxu0
        %v968 = vadd.f32 %v880, %v967
        %v969 = vpop.f32.mrb[0].mxu0
        %970 = vmatprep.mubr.bf16.mxu0 0
        %971 = vmatmul.mubr.bf16.gmra.mrb[0].mxu0 %v852
        %v972 = vpop.f32.mrb[0].mxu0
        %v973 = vadd.f32 %v880, %v972
        %v974 = vpop.f32.mrb[0].mxu0
        %v975 = vpop.f32.mrb[0].mxu0
        %v976 = vadd.f32 %v880, %v975
        %v977 = vpop.f32.mrb[0].mxu0
        %978 = vmatprep.mubr.bf16.mxu0 0
        %979 = vmatmul.mubr.bf16.gmra.mrb[0].mxu0 %v853
        %v980 = vpop.f32.mrb[0].mxu0
        %v981 = vadd.f32 %v880, %v980
        %v982 = vpop.f32.mrb[0].mxu0
        %v983 = vpop.f32.mrb[0].mxu0
        %v984 = vadd.f32 %v880, %v983
        %v985 = vpop.f32.mrb[0].mxu0
        %986 = vmatprep.mubr.bf16.mxu0 0
        %987 = vmatmul.mubr.bf16.gmra.mrb[0].mxu0 %v854
        %v988 = vpop.f32.mrb[0].mxu0
        %v989 = vadd.f32 %v880, %v988
        %v990 = vpop.f32.mrb[0].mxu0
        %v991 = vpop.f32.mrb[0].mxu0
        %v992 = vadd.f32 %v880, %v991
        %v993 = vpop.f32.mrb[0].mxu0
        %994 = vmatprep.mubr.bf16.mxu0 0
        %995 = vmatmul.mubr.bf16.gmra.mrb[0].mxu0 %v855
        %v996 = vpop.f32.mrb[0].mxu0
        %v997 = vadd.f32 %v880, %v996
        %v998 = vpop.f32.mrb[0].mxu0
        %v999 = vpop.f32.mrb[0].mxu0
        %v1000 = vadd.f32 %v880, %v999
        %v1001 = vpop.f32.mrb[0].mxu0
        %1002 = vmatprep.mubr.bf16.mxu0 0
        %1003 = vmatmul.mubr.bf16.gmra.mrb[0].mxu0 %v856
        %v1004 = vpop.f32.mrb[0].mxu0
        %v1005 = vadd.f32 %v880, %v1004
        %v1006 = vpop.f32.mrb[0].mxu0
        %v1007 = vpop.f32.mrb[0].mxu0
        %v1008 = vadd.f32 %v880, %v1007
        %v1009 = vpop.f32.mrb[0].mxu0
        %1010 = vmatprep.mubr.bf16.mxu0 0
        %1011 = vmatmul.mubr.bf16.gmra.mrb[0].mxu0 %v857
        %v1012 = vpop.f32.mrb[0].mxu0
        %v1013 = vadd.f32 %v880, %v1012
        %v1014 = vpop.f32.mrb[0].mxu0
        %v1015 = vpop.f32.mrb[0].mxu0
        %v1016 = vadd.f32 %v880, %v1015
        %v1017 = vpop.f32.mrb[0].mxu0
        %1018 = vmatprep.mubr.bf16.mxu0 0
        %1019 = vmatmul.mubr.bf16.gmra.mrb[0].mxu0 %v858
        %v1020 = vpop.f32.mrb[0].mxu0
        %v1021 = vadd.f32 %v880, %v1020
        %v1022 = vpop.f32.mrb[0].mxu0
        %v1023 = vpop.f32.mrb[0].mxu0
        %v1024 = vadd.f32 %v880, %v1023
        %v1025 = vpop.f32.mrb[0].mxu0
        %1026 = vdwg.mxu0
        %v1027 = vmax.f32 %v965, 0.0
        %v1028 = vmax.f32 %v968, 0.0
        %v1029 = vmax.f32 %v973, 0.0
        %v1030 = vmax.f32 %v976, 0.0
        %v1031 = vmax.f32 %v981, 0.0
        %v1032 = vmax.f32 %v984, 0.0
        %v1033 = vmax.f32 %v989, 0.0
        %v1034 = vmax.f32 %v992, 0.0
        %v1035 = vmax.f32 %v997, 0.0
        %v1036 = vmax.f32 %v1000, 0.0
        %v1037 = vmax.f32 %v1005, 0.0
        %v1038 = vmax.f32 %v1008, 0.0
        %v1039 = vmax.f32 %v1013, 0.0
        %v1040 = vmax.f32 %v1016, 0.0
        %v1041 = vmax.f32 %v1021, 0.0
        %v1042 = vmax.f32 %v1024, 0.0
        %v1043 = vpack.c.bf16 %v1028, %v1027
        %v1044 = vpack.c.bf16 %v1030, %v1029
        %v1045 = vpack.c.bf16 %v1032, %v1031
        %v1046 = vpack.c.bf16 %v1034, %v1033
        %v1047 = vpack.c.bf16 %v1036, %v1035
        %v1048 = vpack.c.bf16 %v1038, %v1037
        %v1049 = vpack.c.bf16 %v1040, %v1039
        %v1050 = vpack.c.bf16 %v1042, %v1041
        %v1051 = vld [vmem:[#allocation10] sm:$0xff]
        %v1052 = vld [vmem:[#allocation10 + $0x8] sm:$0xff]
        %v1053 = vld [vmem:[#allocation10 + $0x10] sm:$0xff]
        %v1054 = vld [vmem:[#allocation10 + $0x18] sm:$0xff]
        %v1055 = vld [vmem:[#allocation10 + $0x20] sm:$0xff]
        %v1056 = vld [vmem:[#allocation10 + $0x28] sm:$0xff]
        %v1057 = vld [vmem:[#allocation10 + $0x30] sm:$0xff]
        %v1058 = vld [vmem:[#allocation10 + $0x38] sm:$0xff]
        %v1059 = vld [vmem:[#allocation10 + $0x40] sm:$0xff]
        %v1060 = vld [vmem:[#allocation10 + $0x48] sm:$0xff]
        %v1061 = vld [vmem:[#allocation10 + $0x50] sm:$0xff]
        %v1062 = vld [vmem:[#allocation10 + $0x58] sm:$0xff]
        %v1063 = vld [vmem:[#allocation10 + $0x60] sm:$0xff]
        %v1064 = vld [vmem:[#allocation10 + $0x68] sm:$0xff]
        %v1065 = vld [vmem:[#allocation10 + $0x70] sm:$0xff]
        %v1066 = vld [vmem:[#allocation10 + $0x78] sm:$0xff]
        %v1067 = vld [vmem:[#allocation10 + $0x80] sm:$0xff]
        %v1068 = vld [vmem:[#allocation10 + $0x88] sm:$0xff]
        %v1069 = vld [vmem:[#allocation10 + $0x90] sm:$0xff]
        %v1070 = vld [vmem:[#allocation10 + $0x98] sm:$0xff]
        %v1071 = vld [vmem:[#allocation10 + $0xa0] sm:$0xff]
        %v1072 = vld [vmem:[#allocation10 + $0xa8] sm:$0xff]
        %v1073 = vld [vmem:[#allocation10 + $0xb0] sm:$0xff]
        %v1074 = vld [vmem:[#allocation10 + $0xb8] sm:$0xff]
        %v1075 = vld [vmem:[#allocation10 + $0xc0] sm:$0xff]
        %v1076 = vld [vmem:[#allocation10 + $0xc8] sm:$0xff]
        %v1077 = vld [vmem:[#allocation10 + $0xd0] sm:$0xff]
        %v1078 = vld [vmem:[#allocation10 + $0xd8] sm:$0xff]
        %v1079 = vld [vmem:[#allocation10 + $0xe0] sm:$0xff]
        %v1080 = vld [vmem:[#allocation10 + $0xe8] sm:$0xff]
        %v1081 = vld [vmem:[#allocation10 + $0xf0] sm:$0xff]
        %v1082 = vld [vmem:[#allocation10 + $0xf8] sm:$0xff]
        %v1083 = vld [vmem:[%s8] sm:$0xf]
        %v1085 = vlaneseq
        %v1086 = vshrl.u32 %v1085, 7
        %v1087 = vsub.s32 0, %v1086
        %v1088 = vrot.slane %v1083, %v1087
        %v1089 = vlaneseq
        %v1090 = vshrl.u32 %v1089, 7
        %v1091 = vsub.s32 1, %v1090
        %v1092 = vrot.slane %v1083, %v1091
        %v1093 = vlaneseq
        %v1094 = vshrl.u32 %v1093, 7
        %v1095 = vsub.s32 2, %v1094
        %v1096 = vrot.slane %v1083, %v1095
        %v1097 = vlaneseq
        %v1098 = vshrl.u32 %v1097, 7
        %v1099 = vsub.s32 3, %v1098
        %v1100 = vrot.slane %v1083, %v1099
        %v1137 = vunpack.c.l.b16 %v1051
        %v1138 = vunpack.c.h.b16 %v1051
        %v1139 = vunpack.c.l.b16 %v1052
        %v1140 = vunpack.c.h.b16 %v1052
        %v1141 = vunpack.c.l.b16 %v1053
        %v1142 = vunpack.c.h.b16 %v1053
        %v1143 = vunpack.c.l.b16 %v1054
        %v1144 = vunpack.c.h.b16 %v1054
        %v1145 = vunpack.c.l.b16 %v1055
        %v1146 = vunpack.c.h.b16 %v1055
        %v1147 = vunpack.c.l.b16 %v1056
        %v1148 = vunpack.c.h.b16 %v1056
        %v1149 = vunpack.c.l.b16 %v1057
        %v1150 = vunpack.c.h.b16 %v1057
        %v1151 = vunpack.c.l.b16 %v1058
        %v1152 = vunpack.c.h.b16 %v1058
        %v1153 = vunpack.c.l.b16 %v1059
        %v1154 = vunpack.c.h.b16 %v1059
        %v1155 = vunpack.c.l.b16 %v1060
        %v1156 = vunpack.c.h.b16 %v1060
        %v1157 = vunpack.c.l.b16 %v1061
        %v1158 = vunpack.c.h.b16 %v1061
        %v1159 = vunpack.c.l.b16 %v1062
        %v1160 = vunpack.c.h.b16 %v1062
        %v1161 = vunpack.c.l.b16 %v1063
        %v1162 = vunpack.c.h.b16 %v1063
        %v1163 = vunpack.c.l.b16 %v1064
        %v1164 = vunpack.c.h.b16 %v1064
        %v1165 = vunpack.c.l.b16 %v1065
        %v1166 = vunpack.c.h.b16 %v1065
        %v1167 = vunpack.c.l.b16 %v1066
        %v1168 = vunpack.c.h.b16 %v1066
        %v1169 = vunpack.c.l.b16 %v1067
        %v1170 = vunpack.c.h.b16 %v1067
        %v1171 = vunpack.c.l.b16 %v1068
        %v1172 = vunpack.c.h.b16 %v1068
        %v1173 = vunpack.c.l.b16 %v1069
        %v1174 = vunpack.c.h.b16 %v1069
        %v1175 = vunpack.c.l.b16 %v1070
        %v1176 = vunpack.c.h.b16 %v1070
        %v1177 = vunpack.c.l.b16 %v1071
        %v1178 = vunpack.c.h.b16 %v1071
        %v1179 = vunpack.c.l.b16 %v1072
        %v1180 = vunpack.c.h.b16 %v1072
        %v1181 = vunpack.c.l.b16 %v1073
        %v1182 = vunpack.c.h.b16 %v1073
        %v1183 = vunpack.c.l.b16 %v1074
        %v1184 = vunpack.c.h.b16 %v1074
        %v1185 = vunpack.c.l.b16 %v1075
        %v1186 = vunpack.c.h.b16 %v1075
        %v1187 = vunpack.c.l.b16 %v1076
        %v1188 = vunpack.c.h.b16 %v1076
        %v1189 = vunpack.c.l.b16 %v1077
        %v1190 = vunpack.c.h.b16 %v1077
        %v1191 = vunpack.c.l.b16 %v1078
        %v1192 = vunpack.c.h.b16 %v1078
        %v1193 = vunpack.c.l.b16 %v1079
        %v1194 = vunpack.c.h.b16 %v1079
        %v1195 = vunpack.c.l.b16 %v1080
        %v1196 = vunpack.c.h.b16 %v1080
        %v1197 = vunpack.c.l.b16 %v1081
        %v1198 = vunpack.c.h.b16 %v1081
        %v1199 = vunpack.c.l.b16 %v1082
        %v1200 = vunpack.c.h.b16 %v1082
        %v1201 = vpack.c.b16 %v1141, %v1137
        %v1202 = vpack.c.b16 %v1142, %v1138
        %v1203 = vpack.c.b16 %v1143, %v1139
        %v1204 = vpack.c.b16 %v1144, %v1140
        %v1205 = vpack.c.b16 %v1149, %v1145
        %v1206 = vpack.c.b16 %v1150, %v1146
        %v1207 = vpack.c.b16 %v1151, %v1147
        %v1208 = vpack.c.b16 %v1152, %v1148
        %v1209 = vpack.c.b16 %v1157, %v1153
        %v1210 = vpack.c.b16 %v1158, %v1154
        %v1211 = vpack.c.b16 %v1159, %v1155
        %v1212 = vpack.c.b16 %v1160, %v1156
        %v1213 = vpack.c.b16 %v1165, %v1161
        %v1214 = vpack.c.b16 %v1166, %v1162
        %v1215 = vpack.c.b16 %v1167, %v1163
        %v1216 = vpack.c.b16 %v1168, %v1164
        %v1217 = vpack.c.b16 %v1173, %v1169
        %v1218 = vpack.c.b16 %v1174, %v1170
        %v1219 = vpack.c.b16 %v1175, %v1171
        %v1220 = vpack.c.b16 %v1176, %v1172
        %v1221 = vpack.c.b16 %v1181, %v1177
        %v1222 = vpack.c.b16 %v1182, %v1178
        %v1223 = vpack.c.b16 %v1183, %v1179
        %v1224 = vpack.c.b16 %v1184, %v1180
        %v1225 = vpack.c.b16 %v1189, %v1185
        %v1226 = vpack.c.b16 %v1190, %v1186
        %v1227 = vpack.c.b16 %v1191, %v1187
        %v1228 = vpack.c.b16 %v1192, %v1188
        %v1229 = vpack.c.b16 %v1197, %v1193
        %v1230 = vpack.c.b16 %v1198, %v1194
        %v1231 = vpack.c.b16 %v1199, %v1195
        %v1232 = vpack.c.b16 %v1200, %v1196
        %1265 = vmatprep.subr.bf16.mxu0 %v1202
        %1266 = vmatpush1.bf16.msra.mxu0 %v1201
        %1267 = vmatprep.subr.bf16.mxu0 %v1206
        %1268 = vmatpush1.bf16.msra.mxu0 %v1205
        %1269 = vmatprep.subr.bf16.mxu0 %v1210
        %1270 = vmatpush1.bf16.msra.mxu0 %v1209
        %1271 = vmatprep.subr.bf16.mxu0 %v1214
        %1272 = vmatpush1.bf16.msra.mxu0 %v1213
        %1273 = vmatprep.subr.bf16.mxu0 %v1218
        %1274 = vmatpush1.bf16.msra.mxu0 %v1217
        %1275 = vmatprep.subr.bf16.mxu0 %v1222
        %1276 = vmatpush1.bf16.msra.mxu0 %v1221
        %1277 = vmatprep.subr.bf16.mxu0 %v1226
        %1278 = vmatpush1.bf16.msra.mxu0 %v1225
        %1279 = vmatprep.subr.bf16.mxu0 %v1230
        %1280 = vmatpush1.bf16.msra.mxu0 %v1229
        %1281 = vmatprep.subr.bf16.mxu0 0
        %1282 = vmatpush1.bf16.msra.mxu0 0
        %1283 = vmatprep.subr.bf16.mxu0 0
        %1284 = vmatpush1.bf16.msra.mxu0 0
        %1285 = vmatprep.subr.bf16.mxu0 0
        %1286 = vmatpush1.bf16.msra.mxu0 0
        %1287 = vmatprep.subr.bf16.mxu0 0
        %1288 = vmatpush1.bf16.msra.mxu0 0
        %1289 = vmatprep.subr.bf16.mxu0 0
        %1290 = vmatpush1.bf16.msra.mxu0 0
        %1291 = vmatprep.subr.bf16.mxu0 0
        %1292 = vmatpush1.bf16.msra.mxu0 0
        %1293 = vmatprep.subr.bf16.mxu0 0
        %1294 = vmatpush1.bf16.msra.mxu0 0
        %1295 = vmatprep.subr.bf16.mxu0 0
        %1296 = vmatpush1.bf16.msra.mxu0 0
        %1297 = vmatprep.mubr.bf16.mxu0 0
        %1298 = vmatmul.mubr.bf16.gmra.mrb[0].mxu0 %v1043
        %v1299 = vpop.f32.mrb[0].mxu0
        %v1300 = vadd.f32 %v1088, %v1299
        %v1301 = vpop.f32.mrb[0].mxu0
        %v1302 = vadd.f32 %v1092, %v1301
        %v1303 = vpop.f32.mrb[0].mxu0
        %v1304 = vadd.f32 %v1088, %v1303
        %v1305 = vpop.f32.mrb[0].mxu0
        %v1306 = vadd.f32 %v1092, %v1305
        %1307 = vmatprep.mubr.bf16.mxu0 0
        %1308 = vmatmul.mubr.bf16.gmra.mrb[0].mxu0 %v1044
        %v1309 = vpop.f32.mrb[0].mxu0
        %v1310 = vadd.f32 %v1088, %v1309
        %v1311 = vpop.f32.mrb[0].mxu0
        %v1312 = vadd.f32 %v1092, %v1311
        %v1313 = vpop.f32.mrb[0].mxu0
        %v1314 = vadd.f32 %v1088, %v1313
        %v1315 = vpop.f32.mrb[0].mxu0
        %v1316 = vadd.f32 %v1092, %v1315
        %1317 = vmatprep.mubr.bf16.mxu0 0
        %1318 = vmatmul.mubr.bf16.gmra.mrb[0].mxu0 %v1045
        %v1319 = vpop.f32.mrb[0].mxu0
        %v1320 = vadd.f32 %v1088, %v1319
        %v1321 = vpop.f32.mrb[0].mxu0
        %v1322 = vadd.f32 %v1092, %v1321
        %v1323 = vpop.f32.mrb[0].mxu0
        %v1324 = vadd.f32 %v1088, %v1323
        %v1325 = vpop.f32.mrb[0].mxu0
        %v1326 = vadd.f32 %v1092, %v1325
        %1327 = vmatprep.mubr.bf16.mxu0 0
        %1328 = vmatmul.mubr.bf16.gmra.mrb[0].mxu0 %v1046
        %v1329 = vpop.f32.mrb[0].mxu0
        %v1330 = vadd.f32 %v1088, %v1329
        %v1331 = vpop.f32.mrb[0].mxu0
        %v1332 = vadd.f32 %v1092, %v1331
        %v1333 = vpop.f32.mrb[0].mxu0
        %v1334 = vadd.f32 %v1088, %v1333
        %v1335 = vpop.f32.mrb[0].mxu0
        %v1336 = vadd.f32 %v1092, %v1335
        %1337 = vmatprep.mubr.bf16.mxu0 0
        %1338 = vmatmul.mubr.bf16.gmra.mrb[0].mxu0 %v1047
        %v1339 = vpop.f32.mrb[0].mxu0
        %v1340 = vadd.f32 %v1088, %v1339
        %v1341 = vpop.f32.mrb[0].mxu0
        %v1342 = vadd.f32 %v1092, %v1341
        %v1343 = vpop.f32.mrb[0].mxu0
        %v1344 = vadd.f32 %v1088, %v1343
        %v1345 = vpop.f32.mrb[0].mxu0
        %v1346 = vadd.f32 %v1092, %v1345
        %1347 = vmatprep.mubr.bf16.mxu0 0
        %1348 = vmatmul.mubr.bf16.gmra.mrb[0].mxu0 %v1048
        %v1349 = vpop.f32.mrb[0].mxu0
        %v1350 = vadd.f32 %v1088, %v1349
        %v1351 = vpop.f32.mrb[0].mxu0
        %v1352 = vadd.f32 %v1092, %v1351
        %v1353 = vpop.f32.mrb[0].mxu0
        %v1354 = vadd.f32 %v1088, %v1353
        %v1355 = vpop.f32.mrb[0].mxu0
        %v1356 = vadd.f32 %v1092, %v1355
        %1357 = vmatprep.mubr.bf16.mxu0 0
        %1358 = vmatmul.mubr.bf16.gmra.mrb[0].mxu0 %v1049
        %v1359 = vpop.f32.mrb[0].mxu0
        %v1360 = vadd.f32 %v1088, %v1359
        %v1361 = vpop.f32.mrb[0].mxu0
        %v1362 = vadd.f32 %v1092, %v1361
        %v1363 = vpop.f32.mrb[0].mxu0
        %v1364 = vadd.f32 %v1088, %v1363
        %v1365 = vpop.f32.mrb[0].mxu0
        %v1366 = vadd.f32 %v1092, %v1365
        %1367 = vmatprep.mubr.bf16.mxu0 0
        %1368 = vmatmul.mubr.bf16.gmra.mrb[0].mxu0 %v1050
        %v1369 = vpop.f32.mrb[0].mxu0
        %v1370 = vadd.f32 %v1088, %v1369
        %v1371 = vpop.f32.mrb[0].mxu0
        %v1372 = vadd.f32 %v1092, %v1371
        %v1373 = vpop.f32.mrb[0].mxu0
        %v1374 = vadd.f32 %v1088, %v1373
        %v1375 = vpop.f32.mrb[0].mxu0
        %v1376 = vadd.f32 %v1092, %v1375
        %1377 = vdwg.mxu0
        %1378 = vmatprep.subr.bf16.mxu0 %v1204
        %1379 = vmatpush1.bf16.msra.mxu0 %v1203
        %1380 = vmatprep.subr.bf16.mxu0 %v1208
        %1381 = vmatpush1.bf16.msra.mxu0 %v1207
        %1382 = vmatprep.subr.bf16.mxu0 %v1212
        %1383 = vmatpush1.bf16.msra.mxu0 %v1211
        %1384 = vmatprep.subr.bf16.mxu0 %v1216
        %1385 = vmatpush1.bf16.msra.mxu0 %v1215
        %1386 = vmatprep.subr.bf16.mxu0 %v1220
        %1387 = vmatpush1.bf16.msra.mxu0 %v1219
        %1388 = vmatprep.subr.bf16.mxu0 %v1224
        %1389 = vmatpush1.bf16.msra.mxu0 %v1223
        %1390 = vmatprep.subr.bf16.mxu0 %v1228
        %1391 = vmatpush1.bf16.msra.mxu0 %v1227
        %1392 = vmatprep.subr.bf16.mxu0 %v1232
        %1393 = vmatpush1.bf16.msra.mxu0 %v1231
        %1394 = vmatprep.subr.bf16.mxu0 0
        %1395 = vmatpush1.bf16.msra.mxu0 0
        %1396 = vmatprep.subr.bf16.mxu0 0
        %1397 = vmatpush1.bf16.msra.mxu0 0
        %1398 = vmatprep.subr.bf16.mxu0 0
        %1399 = vmatpush1.bf16.msra.mxu0 0
        %1400 = vmatprep.subr.bf16.mxu0 0
        %1401 = vmatpush1.bf16.msra.mxu0 0
        %1402 = vmatprep.subr.bf16.mxu0 0
        %1403 = vmatpush1.bf16.msra.mxu0 0
        %1404 = vmatprep.subr.bf16.mxu0 0
        %1405 = vmatpush1.bf16.msra.mxu0 0
        %1406 = vmatprep.subr.bf16.mxu0 0
        %1407 = vmatpush1.bf16.msra.mxu0 0
        %1408 = vmatprep.subr.bf16.mxu0 0
        %1409 = vmatpush1.bf16.msra.mxu0 0
        %1410 = vmatprep.mubr.bf16.mxu0 0
        %1411 = vmatmul.mubr.bf16.gmra.mrb[0].mxu0 %v1043
        %v1412 = vpop.f32.mrb[0].mxu0
        %v1413 = vadd.f32 %v1096, %v1412
        %v1414 = vpop.f32.mrb[0].mxu0
        %v1415 = vadd.f32 %v1100, %v1414
        %v1416 = vpop.f32.mrb[0].mxu0
        %v1417 = vadd.f32 %v1096, %v1416
        %v1418 = vpop.f32.mrb[0].mxu0
        %v1419 = vadd.f32 %v1100, %v1418
        %1420 = vmatprep.mubr.bf16.mxu0 0
        %1421 = vmatmul.mubr.bf16.gmra.mrb[0].mxu0 %v1044
        %v1422 = vpop.f32.mrb[0].mxu0
        %v1423 = vadd.f32 %v1096, %v1422
        %v1424 = vpop.f32.mrb[0].mxu0
        %v1425 = vadd.f32 %v1100, %v1424
        %v1426 = vpop.f32.mrb[0].mxu0
        %v1427 = vadd.f32 %v1096, %v1426
        %v1428 = vpop.f32.mrb[0].mxu0
        %v1429 = vadd.f32 %v1100, %v1428
        %1430 = vmatprep.mubr.bf16.mxu0 0
        %1431 = vmatmul.mubr.bf16.gmra.mrb[0].mxu0 %v1045
        %v1432 = vpop.f32.mrb[0].mxu0
        %v1433 = vadd.f32 %v1096, %v1432
        %v1434 = vpop.f32.mrb[0].mxu0
        %v1435 = vadd.f32 %v1100, %v1434
        %v1436 = vpop.f32.mrb[0].mxu0
        %v1437 = vadd.f32 %v1096, %v1436
        %v1438 = vpop.f32.mrb[0].mxu0
        %v1439 = vadd.f32 %v1100, %v1438
        %1440 = vmatprep.mubr.bf16.mxu0 0
        %1441 = vmatmul.mubr.bf16.gmra.mrb[0].mxu0 %v1046
        %v1442 = vpop.f32.mrb[0].mxu0
        %v1443 = vadd.f32 %v1096, %v1442
        %v1444 = vpop.f32.mrb[0].mxu0
        %v1445 = vadd.f32 %v1100, %v1444
        %v1446 = vpop.f32.mrb[0].mxu0
        %v1447 = vadd.f32 %v1096, %v1446
        %v1448 = vpop.f32.mrb[0].mxu0
        %v1449 = vadd.f32 %v1100, %v1448
        %1450 = vmatprep.mubr.bf16.mxu0 0
        %1451 = vmatmul.mubr.bf16.gmra.mrb[0].mxu0 %v1047
        %v1452 = vpop.f32.mrb[0].mxu0
        %v1453 = vadd.f32 %v1096, %v1452
        %v1454 = vpop.f32.mrb[0].mxu0
        %v1455 = vadd.f32 %v1100, %v1454
        %v1456 = vpop.f32.mrb[0].mxu0
        %v1457 = vadd.f32 %v1096, %v1456
        %v1458 = vpop.f32.mrb[0].mxu0
        %v1459 = vadd.f32 %v1100, %v1458
        %1460 = vmatprep.mubr.bf16.mxu0 0
        %1461 = vmatmul.mubr.bf16.gmra.mrb[0].mxu0 %v1048
        %v1462 = vpop.f32.mrb[0].mxu0
        %v1463 = vadd.f32 %v1096, %v1462
        %v1464 = vpop.f32.mrb[0].mxu0
        %v1465 = vadd.f32 %v1100, %v1464
        %v1466 = vpop.f32.mrb[0].mxu0
        %v1467 = vadd.f32 %v1096, %v1466
        %v1468 = vpop.f32.mrb[0].mxu0
        %v1469 = vadd.f32 %v1100, %v1468
        %1470 = vmatprep.mubr.bf16.mxu0 0
        %1471 = vmatmul.mubr.bf16.gmra.mrb[0].mxu0 %v1049
        %v1472 = vpop.f32.mrb[0].mxu0
        %v1473 = vadd.f32 %v1096, %v1472
        %v1474 = vpop.f32.mrb[0].mxu0
        %v1475 = vadd.f32 %v1100, %v1474
        %v1476 = vpop.f32.mrb[0].mxu0
        %v1477 = vadd.f32 %v1096, %v1476
        %v1478 = vpop.f32.mrb[0].mxu0
        %v1479 = vadd.f32 %v1100, %v1478
        %1480 = vmatprep.mubr.bf16.mxu0 0
        %1481 = vmatmul.mubr.bf16.gmra.mrb[0].mxu0 %v1050
        %v1482 = vpop.f32.mrb[0].mxu0
        %v1483 = vadd.f32 %v1096, %v1482
        %v1484 = vpop.f32.mrb[0].mxu0
        %v1485 = vadd.f32 %v1100, %v1484
        %v1486 = vpop.f32.mrb[0].mxu0
        %v1487 = vadd.f32 %v1096, %v1486
        %v1488 = vpop.f32.mrb[0].mxu0
        %v1489 = vadd.f32 %v1100, %v1488
        %1490 = vdwg.mxu0
        %1491 = vst [vmem:[%s439] sm:$0xff] %v1300
        %1492 = vst [vmem:[%s439 + $0x8] sm:$0xff] %v1302
        %1493 = vst [vmem:[%s439 + $0x10] sm:$0xff] %v1304
        %1494 = vst [vmem:[%s439 + $0x18] sm:$0xff] %v1306
        %1495 = vst [vmem:[%s439 + $0x20] sm:$0xff] %v1310
        %1496 = vst [vmem:[%s439 + $0x28] sm:$0xff] %v1312
        %1497 = vst [vmem:[%s439 + $0x30] sm:$0xff] %v1314
        %1498 = vst [vmem:[%s439 + $0x38] sm:$0xff] %v1316
        %1499 = vst [vmem:[%s439 + $0x40] sm:$0xff] %v1320
        %1500 = vst [vmem:[%s439 + $0x48] sm:$0xff] %v1322
        %1501 = vst [vmem:[%s439 + $0x50] sm:$0xff] %v1324
        %1502 = vst [vmem:[%s439 + $0x58] sm:$0xff] %v1326
        %1503 = vst [vmem:[%s439 + $0x60] sm:$0xff] %v1330
        %1504 = vst [vmem:[%s439 + $0x68] sm:$0xff] %v1332
        %1505 = vst [vmem:[%s439 + $0x70] sm:$0xff] %v1334
        %1506 = vst [vmem:[%s439 + $0x78] sm:$0xff] %v1336
        %1507 = vst [vmem:[%s439 + $0x80] sm:$0xff] %v1340
        %1508 = vst [vmem:[%s439 + $0x88] sm:$0xff] %v1342
        %1509 = vst [vmem:[%s439 + $0x90] sm:$0xff] %v1344
        %1510 = vst [vmem:[%s439 + $0x98] sm:$0xff] %v1346
        %1511 = vst [vmem:[%s439 + $0xa0] sm:$0xff] %v1350
        %1512 = vst [vmem:[%s439 + $0xa8] sm:$0xff] %v1352
        %1513 = vst [vmem:[%s439 + $0xb0] sm:$0xff] %v1354
        %1514 = vst [vmem:[%s439 + $0xb8] sm:$0xff] %v1356
        %1515 = vst [vmem:[%s439 + $0xc0] sm:$0xff] %v1360
        %1516 = vst [vmem:[%s439 + $0xc8] sm:$0xff] %v1362
        %1517 = vst [vmem:[%s439 + $0xd0] sm:$0xff] %v1364
        %1518 = vst [vmem:[%s439 + $0xd8] sm:$0xff] %v1366
        %1519 = vst [vmem:[%s439 + $0xe0] sm:$0xff] %v1370
        %1520 = vst [vmem:[%s439 + $0xe8] sm:$0xff] %v1372
        %1521 = vst [vmem:[%s439 + $0xf0] sm:$0xff] %v1374
        %1522 = vst [vmem:[%s439 + $0xf8] sm:$0xff] %v1376
        %1523 = vst [vmem:[%s446] sm:$0xff] %v1413
        %1524 = vst [vmem:[%s446 + $0x8] sm:$0xff] %v1415
        %1525 = vst [vmem:[%s446 + $0x10] sm:$0xff] %v1417
        %1526 = vst [vmem:[%s446 + $0x18] sm:$0xff] %v1419
        %1527 = vst [vmem:[%s446 + $0x20] sm:$0xff] %v1423
        %1528 = vst [vmem:[%s446 + $0x28] sm:$0xff] %v1425
        %1529 = vst [vmem:[%s446 + $0x30] sm:$0xff] %v1427
        %1530 = vst [vmem:[%s446 + $0x38] sm:$0xff] %v1429
        %1531 = vst [vmem:[%s446 + $0x40] sm:$0xff] %v1433
        %1532 = vst [vmem:[%s446 + $0x48] sm:$0xff] %v1435
        %1533 = vst [vmem:[%s446 + $0x50] sm:$0xff] %v1437
        %1534 = vst [vmem:[%s446 + $0x58] sm:$0xff] %v1439
        %1535 = vst [vmem:[%s446 + $0x60] sm:$0xff] %v1443
        %1536 = vst [vmem:[%s446 + $0x68] sm:$0xff] %v1445
        %1537 = vst [vmem:[%s446 + $0x70] sm:$0xff] %v1447
        %1538 = vst [vmem:[%s446 + $0x78] sm:$0xff] %v1449
        %1539 = vst [vmem:[%s446 + $0x80] sm:$0xff] %v1453
        %1540 = vst [vmem:[%s446 + $0x88] sm:$0xff] %v1455
        %1541 = vst [vmem:[%s446 + $0x90] sm:$0xff] %v1457
        %1542 = vst [vmem:[%s446 + $0x98] sm:$0xff] %v1459
        %1543 = vst [vmem:[%s446 + $0xa0] sm:$0xff] %v1463
        %1544 = vst [vmem:[%s446 + $0xa8] sm:$0xff] %v1465
        %1545 = vst [vmem:[%s446 + $0xb0] sm:$0xff] %v1467
        %1546 = vst [vmem:[%s446 + $0xb8] sm:$0xff] %v1469
        %1547 = vst [vmem:[%s446 + $0xc0] sm:$0xff] %v1473
        %1548 = vst [vmem:[%s446 + $0xc8] sm:$0xff] %v1475
        %1549 = vst [vmem:[%s446 + $0xd0] sm:$0xff] %v1477
        %1550 = vst [vmem:[%s446 + $0xd8] sm:$0xff] %v1479
        %1551 = vst [vmem:[%s446 + $0xe0] sm:$0xff] %v1483
        %1552 = vst [vmem:[%s446 + $0xe8] sm:$0xff] %v1485
        %1553 = vst [vmem:[%s446 + $0xf0] sm:$0xff] %v1487
        %1554 = vst [vmem:[%s446 + $0xf8] sm:$0xff] %v1489
        %s1555 = sand.u32 %s235, 1
        %s1556 = scalar_lea.sflag [#allocation4], %s1555
        %s1557 = sand.u32 %s235, 1
        %s1558 = smul.addr %s1557, 256
        %s1559 = scalar_lea.vmem [#allocation11], %s1558
        %s1560 = sand.u32 %s261, 1
        %s1561 = scalar_lea.sflag [#allocation13], %s1560
        %s1562 = sand.u32 %s261, 1
        %s1563 = smul.addr %s1562, 256
        %s1564 = scalar_lea.vmem [#allocation12], %s1563
        // Predicated region
        $region77: #{tpu_custom_call.1} parent=55 // pred_check
          %p1565 = pneg %p245
        $region78: #{tpu_custom_call.1} parent=55 // pred_check_branch
          %1567 = sbr.rel (%p1565) target = $region80
        $region79: #{tpu_custom_call.1} parent=55 // pred_region
          %s1568 = smul.u32 16, %s33
          %s1570 = ssub.s32 4096, 4096
          %1571 = vsyncadd %s1556, %s1570
          %s1572 = smul.addr %s1568, 2
          %s1573 = smul.addr %s1572, 128
          %s1574 = scalar_lea.hbm %s9, %s1573
          %s1575 = sshll.u32 %s1559, 4
          %s1576 = int_to_ptr.vmem [resolvable:$true] %s1575
          %1581 = dma.vmem_to_hbm [thread:$0]  %s1576, 4096, %s1574, %s1556, 256, 256, 16
        $region80: #{tpu_custom_call.1} parent=55 // pred_fallthru
          _
        // Predicated region
        $region81: #{tpu_custom_call.1} parent=55 // pred_check
          %p1582 = pneg %p271
        $region82: #{tpu_custom_call.1} parent=55 // pred_check_branch
          %1584 = sbr.rel (%p1582) target = $region84
        $region83: #{tpu_custom_call.1} parent=55 // pred_region
          %s1585 = smul.u32 16, %s33
          %s1587 = ssub.s32 4096, 4096
          %1588 = vsyncadd %s1561, %s1587
          %s1589 = smul.addr %s1585, 2
          %s1590 = smul.addr %s1589, 128
          %s1591 = scalar_lea.hbm %s10, %s1590
          %s1592 = sshll.u32 %s1564, 4
          %s1593 = int_to_ptr.vmem [resolvable:$true] %s1592
          %1598 = dma.vmem_to_hbm [thread:$0]  %s1593, 4096, %s1591, %s1561, 256, 256, 16
        $region84: #{tpu_custom_call.1} parent=55 // pred_fallthru
          _
      $region56: #{tpu_custom_call.1} parent=5 // pred_fallthru
        _
      %p1599 = scmp.le.s32.totalorder 2, %s28
      // Predicated region
      $region85: #{tpu_custom_call.1} parent=5 // pred_check
        %p1600 = pneg %p1599
      $region86: #{tpu_custom_call.1} parent=5 // pred_check_branch
        %1602 = sbr.rel (%p1600) target = $region88
      $region87: #{tpu_custom_call.1} parent=5 // pred_region
        %s1603 = ssub.s32 %s28, 2
        // Predicated region
        $region89: #{tpu_custom_call.1} parent=87 // pred_check
          %p1604 = pneg %p251
        $region90: #{tpu_custom_call.1} parent=87 // pred_check_branch
          %1606 = sbr.rel (%p1604) target = $region92
        $region91: #{tpu_custom_call.1} parent=87 // pred_region
          %s1607 = sand.u32 %s236, 1
          %s1608 = scalar_lea.sflag [#allocation4], %s1607
          %s1609 = sand.u32 %s236, 1
          %s1610 = smul.addr %s1609, 256
          %s1611 = scalar_lea.vmem [#allocation11], %s1610
          %1612 = dma.done %s1608, 4096
        $region92: #{tpu_custom_call.1} parent=87 // pred_fallthru
          _
        // Predicated region
        $region93: #{tpu_custom_call.1} parent=87 // pred_check
          %p1613 = pneg %p277
        $region94: #{tpu_custom_call.1} parent=87 // pred_check_branch
          %1615 = sbr.rel (%p1613) target = $region96
        $region95: #{tpu_custom_call.1} parent=87 // pred_region
          %s1616 = sand.u32 %s262, 1
          %s1617 = scalar_lea.sflag [#allocation13], %s1616
          %s1618 = sand.u32 %s262, 1
          %s1619 = smul.addr %s1618, 256
          %s1620 = scalar_lea.vmem [#allocation12], %s1619
          %1621 = dma.done %s1617, 4096
        $region96: #{tpu_custom_call.1} parent=87 // pred_fallthru
          _
      $region88: #{tpu_custom_call.1} parent=5 // pred_fallthru
        _
    $region6: #{tpu_custom_call.1} parent=1 // loop_footer
      %s32 = sadd.s32 1, %s28
    $region7: #{tpu_custom_call.1} parent=1 // loop_footer_branch
      %27 = sbr.rel target = $region3
    $region8: #{tpu_custom_call.1} parent=1 // loop_exit
      _
    %1622 = vsyncpa [#allocation3], 1
    %s1623 = scalar_lea.sflag [#allocation3], 1
    %1624 = vsyncpa %s1623, 1
    %1625 = vsyncpa [#allocation6], 1
    %1626 = vsyncpa [#allocation9], 1
    %1627 = vsyncpa [#allocation4], 1
    %s1628 = scalar_lea.sflag [#allocation4], 1
    %1629 = vsyncpa %s1628, 1
    %1630 = vsyncpa [#allocation13], 1
    %s1631 = scalar_lea.sflag [#allocation13], 1
    %1632 = vsyncpa %s1631, 1

</llo_original>
